<compile_context>
chip_gen: v5e
topology: v5e:2x2
jax: 0.10.0
libtpu: 0.0.40
codegen_flags: <defaults>
</compile_context>

<pallas_src>
import math
from functools import partial

import jax
import jax.numpy as jnp
from jax import lax
from jax.experimental import pallas as pl
from jax.experimental.pallas import tpu as pltpu

EMB = 50         # GloVe-50 embedding dim (LSTM input_size=50 in the module)
HIDDEN = 32      # 4*H = 128 -> exactly one lane width for the gate vector
LIN1 = 64
NCLASS = 5
VOCAB = 20
VOCAB_PAD = 32   # pad fused token->gates table K-dim to a multiple of 8


def lstm_mlp_kernel(tok_ref, wcat_ref, out_ref, *, batch, hidden, vocab_pad, nclass):
    """Single-invocation kernel: fused token->gates projection, LSTM recurrence,
    last-valid-timestep select, and the folded output linear.

    tok_ref  : (T*B, 1)   int32  tokens, time-major flattened (trailing 0 = pad)
    wcat_ref : (VP+2H+8, 4H) f32 packed weights:
               rows [0,VP)        fused (emb @ W_ih^T + b), g-columns pre-scaled x2
               rows [VP,VP+H)     W_hh^T,                    g-columns pre-scaled x2
               rows [VP+H,VP+2H)  W12 = w1^T @ w2^T, lane-padded NCLASS -> 4H
               row   VP+2H        b12 = b1 @ w2^T + b2, lane-padded
    out_ref  : (B, NCLASS) f32
    """
    B, H, VP = batch, hidden, vocab_pad
    TB = tok_ref.shape[0]
    T = TB // B

    # ---- unpack the packed weight slab (static, sublane-aligned offsets) -----
    wtok = wcat_ref[0:VP, :]                          # (VP, 4H)
    whh = wcat_ref[VP:VP + H, :]                      # (H,  4H)
    w12 = wcat_ref[VP + H:VP + 2 * H, :]              # (H,  4H) lanes >= NCLASS are 0
    b12 = wcat_ref[VP + 2 * H:VP + 2 * H + 1, :]      # (1,  4H)

    # ---- hoisted input projection: one (T*B, VP) x (VP, 4H) MXU matmul -------
    tok = tok_ref[...]                                                # (T*B, 1)
    onehot = (tok == lax.broadcasted_iota(jnp.int32, (TB, VP), 1)
              ).astype(jnp.float32)                                   # (T*B, VP)
    gx = jnp.dot(onehot, wtok, preferred_element_type=jnp.float32,
                 precision=lax.Precision.HIGHEST)                     # (T*B, 4H)

    # ---- serial LSTM recurrence, state carried in vregs, fully unrolled ------
    h = jnp.zeros((B, H), jnp.float32)
    c = jnp.zeros((B, H), jnp.float32)
    last = jnp.zeros((B, H), jnp.float32)

    for t in range(T):                                # T static -> unrolled
        gates = gx[t * B:(t + 1) * B, :] + jnp.dot(
            h, whh, preferred_element_type=jnp.float32,
            precision=lax.Precision.HIGHEST)          # (B, 4H); g cols hold 2*g_pre
        sig = jax.nn.sigmoid(gates)                   # single full-vreg EUP pass
        i_g = sig[:, 0:H]
        f_g = sig[:, H:2 * H]
        g_g = 2.0 * sig[:, 2 * H:3 * H] - 1.0         # tanh(g_pre) = 2*sigmoid(2*g_pre)-1
        o_g = sig[:, 3 * H:4 * H]
        c = f_g * c + i_g * g_g
        h = o_g * jnp.tanh(c)
        # capture hidden state at the last *valid* timestep (packed-seq
        # semantics); contract: padding is strictly trailing zeros.  A
        # zero-length row (all padding) keeps last = 0, as pack_padded_sequence
        # would reject it anyway.
        valid = tok[t * B:(t + 1) * B, :] != 0        # (B, 1)
        last = jnp.where(valid, h, last)

    # ---- folded linear1 -> dropout(identity) -> linear2 ----------------------
    y = jnp.dot(last, w12, preferred_element_type=jnp.float32,
                precision=lax.Precision.HIGHEST) + b12                # (B, 4H)
    out_ref[...] = y[:, 0:nclass]


def emojify_rnn_forward(tokens, params):
    B, T = tokens.shape
    H4 = 4 * HIDDEN

    # Only tiny glue outside the kernel: time-major token flatten.
    tok_tb = jnp.transpose(tokens).reshape(T * B, 1).astype(jnp.int32)   # (T*B, 1)

    # All weight prep below is constant-folded by XLA because `params` are jit
    # constants (closed over).  g-gate columns pre-scaled by 2 so the kernel can
    # use the 2*sigmoid(2x)-1 identity with no extra per-step multiply.
    g_scale = jnp.concatenate([jnp.ones((2 * HIDDEN,), jnp.float32),
                               jnp.full((HIDDEN,), 2.0, jnp.float32),
                               jnp.ones((HIDDEN,), jnp.float32)])        # (4H,)
    bias = params["b_ih"] + params["b_hh"]                               # (4H,)
    w_tok = (jnp.dot(params["embedding"], params["w_ih"].T)
             + bias[None, :]) * g_scale[None, :]                         # (VOCAB, 4H)
    w_tok = jnp.pad(w_tok, ((0, VOCAB_PAD - VOCAB), (0, 0)))             # (VP, 4H)
    whh_t = params["w_hh"].T * g_scale[None, :]                          # (H, 4H)
    w12 = jnp.dot(params["w1"].T, params["w2"].T)                        # (H, NCLASS)
    b12 = jnp.dot(params["b1"], params["w2"].T) + params["b2"]           # (NCLASS,)
    w12_p = jnp.pad(w12, ((0, 0), (0, H4 - NCLASS)))                     # (H, 4H)
    b12_p = jnp.pad(b12[None, :], ((0, 7), (0, H4 - NCLASS)))            # (8, 4H)
    wcat = jnp.concatenate([w_tok, whh_t, w12_p, b12_p], axis=0)         # (104, 128)

    vmem = pl.BlockSpec(memory_space=pltpu.MemorySpace.VMEM)
    out = pl.pallas_call(
        partial(lstm_mlp_kernel, batch=B, hidden=HIDDEN,
                vocab_pad=VOCAB_PAD, nclass=NCLASS),
        out_shape=jax.ShapeDtypeStruct((B, NCLASS), jnp.float32),
        in_specs=[vmem, vmem],
        out_specs=vmem,
    )(tok_tb, wcat)
    return out


def xavier_uniform(key, shape):
    fan_out, fan_in = shape                      # PyTorch weight layout (out, in)
    bound = math.sqrt(6.0 / (fan_in + fan_out))
    return jax.random.uniform(key, shape, jnp.float32, -bound, bound)


def init_params(key):
    ks = jax.random.split(key, 5)
    params = {
        # pretrained_embedded_layer stand-in: deterministic random GloVe-like table
        "embedding": 0.1 * jax.random.normal(ks[0], (VOCAB, EMB), jnp.float32),
        # nn.LSTM params (gate order i, f, g, o), xavier weights / 0.01 biases
        "w_ih": xavier_uniform(ks[1], (4 * HIDDEN, EMB)),
        "w_hh": xavier_uniform(ks[2], (4 * HIDDEN, HIDDEN)),
        "b_ih": jnp.full((4 * HIDDEN,), 0.01, jnp.float32),
        "b_hh": jnp.full((4 * HIDDEN,), 0.01, jnp.float32),
        # nn.Linear params, xavier weights / 0.01 biases
        "w1": xavier_uniform(ks[3], (LIN1, HIDDEN)),
        "b1": jnp.full((LIN1,), 0.01, jnp.float32),
        "w2": xavier_uniform(ks[4], (NCLASS, LIN1)),
        "b2": jnp.full((NCLASS,), 0.01, jnp.float32),
    }
    return params


if __name__ == "__main__":
    key = jax.random.PRNGKey(0)
    params = init_params(key)

    # batch=2, seq=8; token id 0 = padding (strictly trailing, per the
    # pack_padded_sequence contract)
    tokens = jnp.array([[3, 7, 1, 9, 2, 0, 0, 0],
                        [5, 4, 8, 2, 6, 7, 1, 3]], dtype=jnp.int32)

    fwd = jax.jit(lambda t: emojify_rnn_forward(t, params))
    out = fwd(tokens)
    jax.block_until_ready(out)
    assert out.shape == (2, NCLASS) and out.dtype == jnp.float32
    print("KERNEL_OK")
</pallas_src>

<mosaic_0001>
module attributes {stable_mosaic.version = 11 : i64} {
  func.func @lstm_mlp_kernel(%arg0: memref<16x1xi32, #tpu.memory_space<vmem>>, %arg1: memref<104x128xf32, #tpu.memory_space<vmem>>, %arg2: memref<2x5xf32, #tpu.memory_space<vmem>>) attributes {dimension_semantics = [], scalar_prefetch = 0 : i64, scratch_operands = 0 : i64, tpu.core_type = #tpu.core_type<tc>} {
    %c0 = arith.constant 0 : index
    %c0_0 = arith.constant 0 : index
    %0 = vector.load %arg1[%c0, %c0_0] : memref<104x128xf32, #tpu.memory_space<vmem>>, vector<32x128xf32>
    %c32 = arith.constant 32 : index
    %c0_1 = arith.constant 0 : index
    %1 = vector.load %arg1[%c32, %c0_1] : memref<104x128xf32, #tpu.memory_space<vmem>>, vector<32x128xf32>
    %c64 = arith.constant 64 : index
    %c0_2 = arith.constant 0 : index
    %2 = vector.load %arg1[%c64, %c0_2] : memref<104x128xf32, #tpu.memory_space<vmem>>, vector<32x128xf32>
    %c96 = arith.constant 96 : index
    %c0_3 = arith.constant 0 : index
    %3 = vector.load %arg1[%c96, %c0_3] : memref<104x128xf32, #tpu.memory_space<vmem>>, vector<1x128xf32>
    %c0_4 = arith.constant 0 : index
    %c0_5 = arith.constant 0 : index
    %4 = vector.load %arg0[%c0_4, %c0_5] : memref<16x1xi32, #tpu.memory_space<vmem>>, vector<16x1xi32>
    %5 = tpu.iota {dimensions = array<i32: 1>} : vector<16x32xi32>
    %6 = vector.broadcast %4 : vector<16x1xi32> to vector<16x32xi32>
    %7 = arith.cmpi eq, %6, %5 : vector<16x32xi32>
    %8 = arith.extui %7 : vector<16x32xi1> to vector<16x32xi32>
    %9 = arith.sitofp %8 : vector<16x32xi32> to vector<16x32xf32>
    %cst = arith.constant dense<0.000000e+00> : vector<16x128xf32>
    %10 = tpu.matmul %9, %0, %cst {dimension_numbers = #tpu.dot_dimension_numbers<[1], [0], [0], [1], [0, 0, 1, 1], [], []>, precision = #tpu.contract_precision<fp32>} : vector<16x32xf32>, vector<32x128xf32>, vector<16x128xf32> -> vector<16x128xf32>
    %cst_6 = arith.constant 0.000000e+00 : f32
    %11 = vector.broadcast %cst_6 : f32 to vector<2x32xf32>
    %cst_7 = arith.constant 0.000000e+00 : f32
    %12 = vector.broadcast %cst_7 : f32 to vector<2x32xf32>
    %cst_8 = arith.constant 0.000000e+00 : f32
    %13 = vector.broadcast %cst_8 : f32 to vector<2x32xf32>
    %14 = vector.extract_strided_slice %10 {offsets = [0, 0], sizes = [2, 128], strides = [1, 1]} : vector<16x128xf32> to vector<2x128xf32>
    %cst_9 = arith.constant dense<0.000000e+00> : vector<2x128xf32>
    %15 = tpu.matmul %11, %1, %cst_9 {dimension_numbers = #tpu.dot_dimension_numbers<[1], [0], [0], [1], [0, 0, 1, 1], [], []>, precision = #tpu.contract_precision<fp32>} : vector<2x32xf32>, vector<32x128xf32>, vector<2x128xf32> -> vector<2x128xf32>
    %16 = arith.addf %14, %15 : vector<2x128xf32>
    %17 = arith.negf %16 : vector<2x128xf32>
    %18 = math.exp %17 : vector<2x128xf32>
    %cst_10 = arith.constant 1.000000e+00 : f32
    %19 = vector.broadcast %cst_10 : f32 to vector<2x128xf32>
    %20 = arith.addf %19, %18 : vector<2x128xf32>
    %21 = arith.divf %19, %20 : vector<2x128xf32>
    %22 = vector.extract_strided_slice %21 {offsets = [0, 0], sizes = [2, 32], strides = [1, 1]} : vector<2x128xf32> to vector<2x32xf32>
    %23 = vector.extract_strided_slice %21 {offsets = [0, 32], sizes = [2, 32], strides = [1, 1]} : vector<2x128xf32> to vector<2x32xf32>
    %24 = vector.extract_strided_slice %21 {offsets = [0, 64], sizes = [2, 32], strides = [1, 1]} : vector<2x128xf32> to vector<2x32xf32>
    %cst_11 = arith.constant 2.000000e+00 : f32
    %25 = vector.broadcast %cst_11 : f32 to vector<2x32xf32>
    %26 = arith.mulf %25, %24 : vector<2x32xf32>
    %cst_12 = arith.constant 1.000000e+00 : f32
    %27 = vector.broadcast %cst_12 : f32 to vector<2x32xf32>
    %28 = arith.subf %26, %27 : vector<2x32xf32>
    %29 = vector.extract_strided_slice %21 {offsets = [0, 96], sizes = [2, 32], strides = [1, 1]} : vector<2x128xf32> to vector<2x32xf32>
    %30 = arith.mulf %23, %12 : vector<2x32xf32>
    %31 = arith.mulf %22, %28 : vector<2x32xf32>
    %32 = arith.addf %30, %31 : vector<2x32xf32>
    %33 = math.tanh %32 : vector<2x32xf32>
    %34 = arith.mulf %29, %33 : vector<2x32xf32>
    %35 = vector.extract_strided_slice %4 {offsets = [0, 0], sizes = [2, 1], strides = [1, 1]} : vector<16x1xi32> to vector<2x1xi32>
    %c0_i32 = arith.constant 0 : i32
    %36 = vector.broadcast %c0_i32 : i32 to vector<2x1xi32>
    %37 = arith.cmpi ne, %35, %36 : vector<2x1xi32>
    %38 = vector.shape_cast %37 : vector<2x1xi1> to vector<2x1xi1>
    %39 = vector.broadcast %38 : vector<2x1xi1> to vector<2x32xi1>
    %40 = arith.select %39, %34, %13 : vector<2x32xi1>, vector<2x32xf32>
    %41 = vector.extract_strided_slice %10 {offsets = [2, 0], sizes = [2, 128], strides = [1, 1]} : vector<16x128xf32> to vector<2x128xf32>
    %cst_13 = arith.constant dense<0.000000e+00> : vector<2x128xf32>
    %42 = tpu.matmul %34, %1, %cst_13 {dimension_numbers = #tpu.dot_dimension_numbers<[1], [0], [0], [1], [0, 0, 1, 1], [], []>, precision = #tpu.contract_precision<fp32>} : vector<2x32xf32>, vector<32x128xf32>, vector<2x128xf32> -> vector<2x128xf32>
    %43 = arith.addf %41, %42 : vector<2x128xf32>
    %44 = arith.negf %43 : vector<2x128xf32>
    %45 = math.exp %44 : vector<2x128xf32>
    %cst_14 = arith.constant 1.000000e+00 : f32
    %46 = vector.broadcast %cst_14 : f32 to vector<2x128xf32>
    %47 = arith.addf %46, %45 : vector<2x128xf32>
    %48 = arith.divf %46, %47 : vector<2x128xf32>
    %49 = vector.extract_strided_slice %48 {offsets = [0, 0], sizes = [2, 32], strides = [1, 1]} : vector<2x128xf32> to vector<2x32xf32>
    %50 = vector.extract_strided_slice %48 {offsets = [0, 32], sizes = [2, 32], strides = [1, 1]} : vector<2x128xf32> to vector<2x32xf32>
    %51 = vector.extract_strided_slice %48 {offsets = [0, 64], sizes = [2, 32], strides = [1, 1]} : vector<2x128xf32> to vector<2x32xf32>
    %cst_15 = arith.constant 2.000000e+00 : f32
    %52 = vector.broadcast %cst_15 : f32 to vector<2x32xf32>
    %53 = arith.mulf %52, %51 : vector<2x32xf32>
    %cst_16 = arith.constant 1.000000e+00 : f32
    %54 = vector.broadcast %cst_16 : f32 to vector<2x32xf32>
    %55 = arith.subf %53, %54 : vector<2x32xf32>
    %56 = vector.extract_strided_slice %48 {offsets = [0, 96], sizes = [2, 32], strides = [1, 1]} : vector<2x128xf32> to vector<2x32xf32>
    %57 = arith.mulf %50, %32 : vector<2x32xf32>
    %58 = arith.mulf %49, %55 : vector<2x32xf32>
    %59 = arith.addf %57, %58 : vector<2x32xf32>
    %60 = math.tanh %59 : vector<2x32xf32>
    %61 = arith.mulf %56, %60 : vector<2x32xf32>
    %62 = vector.extract_strided_slice %4 {offsets = [2, 0], sizes = [2, 1], strides = [1, 1]} : vector<16x1xi32> to vector<2x1xi32>
    %c0_i32_17 = arith.constant 0 : i32
    %63 = vector.broadcast %c0_i32_17 : i32 to vector<2x1xi32>
    %64 = arith.cmpi ne, %62, %63 : vector<2x1xi32>
    %65 = vector.shape_cast %64 : vector<2x1xi1> to vector<2x1xi1>
    %66 = vector.broadcast %65 : vector<2x1xi1> to vector<2x32xi1>
    %67 = arith.select %66, %61, %40 : vector<2x32xi1>, vector<2x32xf32>
    %68 = vector.extract_strided_slice %10 {offsets = [4, 0], sizes = [2, 128], strides = [1, 1]} : vector<16x128xf32> to vector<2x128xf32>
    %cst_18 = arith.constant dense<0.000000e+00> : vector<2x128xf32>
    %69 = tpu.matmul %61, %1, %cst_18 {dimension_numbers = #tpu.dot_dimension_numbers<[1], [0], [0], [1], [0, 0, 1, 1], [], []>, precision = #tpu.contract_precision<fp32>} : vector<2x32xf32>, vector<32x128xf32>, vector<2x128xf32> -> vector<2x128xf32>
    %70 = arith.addf %68, %69 : vector<2x128xf32>
    %71 = arith.negf %70 : vector<2x128xf32>
    %72 = math.exp %71 : vector<2x128xf32>
    %cst_19 = arith.constant 1.000000e+00 : f32
    %73 = vector.broadcast %cst_19 : f32 to vector<2x128xf32>
    %74 = arith.addf %73, %72 : vector<2x128xf32>
    %75 = arith.divf %73, %74 : vector<2x128xf32>
    %76 = vector.extract_strided_slice %75 {offsets = [0, 0], sizes = [2, 32], strides = [1, 1]} : vector<2x128xf32> to vector<2x32xf32>
    %77 = vector.extract_strided_slice %75 {offsets = [0, 32], sizes = [2, 32], strides = [1, 1]} : vector<2x128xf32> to vector<2x32xf32>
    %78 = vector.extract_strided_slice %75 {offsets = [0, 64], sizes = [2, 32], strides = [1, 1]} : vector<2x128xf32> to vector<2x32xf32>
    %cst_20 = arith.constant 2.000000e+00 : f32
    %79 = vector.broadcast %cst_20 : f32 to vector<2x32xf32>
    %80 = arith.mulf %79, %78 : vector<2x32xf32>
    %cst_21 = arith.constant 1.000000e+00 : f32
    %81 = vector.broadcast %cst_21 : f32 to vector<2x32xf32>
    %82 = arith.subf %80, %81 : vector<2x32xf32>
    %83 = vector.extract_strided_slice %75 {offsets = [0, 96], sizes = [2, 32], strides = [1, 1]} : vector<2x128xf32> to vector<2x32xf32>
    %84 = arith.mulf %77, %59 : vector<2x32xf32>
    %85 = arith.mulf %76, %82 : vector<2x32xf32>
    %86 = arith.addf %84, %85 : vector<2x32xf32>
    %87 = math.tanh %86 : vector<2x32xf32>
    %88 = arith.mulf %83, %87 : vector<2x32xf32>
    %89 = vector.extract_strided_slice %4 {offsets = [4, 0], sizes = [2, 1], strides = [1, 1]} : vector<16x1xi32> to vector<2x1xi32>
    %c0_i32_22 = arith.constant 0 : i32
    %90 = vector.broadcast %c0_i32_22 : i32 to vector<2x1xi32>
    %91 = arith.cmpi ne, %89, %90 : vector<2x1xi32>
    %92 = vector.shape_cast %91 : vector<2x1xi1> to vector<2x1xi1>
    %93 = vector.broadcast %92 : vector<2x1xi1> to vector<2x32xi1>
    %94 = arith.select %93, %88, %67 : vector<2x32xi1>, vector<2x32xf32>
    %95 = vector.extract_strided_slice %10 {offsets = [6, 0], sizes = [2, 128], strides = [1, 1]} : vector<16x128xf32> to vector<2x128xf32>
    %cst_23 = arith.constant dense<0.000000e+00> : vector<2x128xf32>
    %96 = tpu.matmul %88, %1, %cst_23 {dimension_numbers = #tpu.dot_dimension_numbers<[1], [0], [0], [1], [0, 0, 1, 1], [], []>, precision = #tpu.contract_precision<fp32>} : vector<2x32xf32>, vector<32x128xf32>, vector<2x128xf32> -> vector<2x128xf32>
    %97 = arith.addf %95, %96 : vector<2x128xf32>
    %98 = arith.negf %97 : vector<2x128xf32>
    %99 = math.exp %98 : vector<2x128xf32>
    %cst_24 = arith.constant 1.000000e+00 : f32
    %100 = vector.broadcast %cst_24 : f32 to vector<2x128xf32>
    %101 = arith.addf %100, %99 : vector<2x128xf32>
    %102 = arith.divf %100, %101 : vector<2x128xf32>
    %103 = vector.extract_strided_slice %102 {offsets = [0, 0], sizes = [2, 32], strides = [1, 1]} : vector<2x128xf32> to vector<2x32xf32>
    %104 = vector.extract_strided_slice %102 {offsets = [0, 32], sizes = [2, 32], strides = [1, 1]} : vector<2x128xf32> to vector<2x32xf32>
    %105 = vector.extract_strided_slice %102 {offsets = [0, 64], sizes = [2, 32], strides = [1, 1]} : vector<2x128xf32> to vector<2x32xf32>
    %cst_25 = arith.constant 2.000000e+00 : f32
    %106 = vector.broadcast %cst_25 : f32 to vector<2x32xf32>
    %107 = arith.mulf %106, %105 : vector<2x32xf32>
    %cst_26 = arith.constant 1.000000e+00 : f32
    %108 = vector.broadcast %cst_26 : f32 to vector<2x32xf32>
    %109 = arith.subf %107, %108 : vector<2x32xf32>
    %110 = vector.extract_strided_slice %102 {offsets = [0, 96], sizes = [2, 32], strides = [1, 1]} : vector<2x128xf32> to vector<2x32xf32>
    %111 = arith.mulf %104, %86 : vector<2x32xf32>
    %112 = arith.mulf %103, %109 : vector<2x32xf32>
    %113 = arith.addf %111, %112 : vector<2x32xf32>
    %114 = math.tanh %113 : vector<2x32xf32>
    %115 = arith.mulf %110, %114 : vector<2x32xf32>
    %116 = vector.extract_strided_slice %4 {offsets = [6, 0], sizes = [2, 1], strides = [1, 1]} : vector<16x1xi32> to vector<2x1xi32>
    %c0_i32_27 = arith.constant 0 : i32
    %117 = vector.broadcast %c0_i32_27 : i32 to vector<2x1xi32>
    %118 = arith.cmpi ne, %116, %117 : vector<2x1xi32>
    %119 = vector.shape_cast %118 : vector<2x1xi1> to vector<2x1xi1>
    %120 = vector.broadcast %119 : vector<2x1xi1> to vector<2x32xi1>
    %121 = arith.select %120, %115, %94 : vector<2x32xi1>, vector<2x32xf32>
    %122 = vector.extract_strided_slice %10 {offsets = [8, 0], sizes = [2, 128], strides = [1, 1]} : vector<16x128xf32> to vector<2x128xf32>
    %cst_28 = arith.constant dense<0.000000e+00> : vector<2x128xf32>
    %123 = tpu.matmul %115, %1, %cst_28 {dimension_numbers = #tpu.dot_dimension_numbers<[1], [0], [0], [1], [0, 0, 1, 1], [], []>, precision = #tpu.contract_precision<fp32>} : vector<2x32xf32>, vector<32x128xf32>, vector<2x128xf32> -> vector<2x128xf32>
    %124 = arith.addf %122, %123 : vector<2x128xf32>
    %125 = arith.negf %124 : vector<2x128xf32>
    %126 = math.exp %125 : vector<2x128xf32>
    %cst_29 = arith.constant 1.000000e+00 : f32
    %127 = vector.broadcast %cst_29 : f32 to vector<2x128xf32>
    %128 = arith.addf %127, %126 : vector<2x128xf32>
    %129 = arith.divf %127, %128 : vector<2x128xf32>
    %130 = vector.extract_strided_slice %129 {offsets = [0, 0], sizes = [2, 32], strides = [1, 1]} : vector<2x128xf32> to vector<2x32xf32>
    %131 = vector.extract_strided_slice %129 {offsets = [0, 32], sizes = [2, 32], strides = [1, 1]} : vector<2x128xf32> to vector<2x32xf32>
    %132 = vector.extract_strided_slice %129 {offsets = [0, 64], sizes = [2, 32], strides = [1, 1]} : vector<2x128xf32> to vector<2x32xf32>
    %cst_30 = arith.constant 2.000000e+00 : f32
    %133 = vector.broadcast %cst_30 : f32 to vector<2x32xf32>
    %134 = arith.mulf %133, %132 : vector<2x32xf32>
    %cst_31 = arith.constant 1.000000e+00 : f32
    %135 = vector.broadcast %cst_31 : f32 to vector<2x32xf32>
    %136 = arith.subf %134, %135 : vector<2x32xf32>
    %137 = vector.extract_strided_slice %129 {offsets = [0, 96], sizes = [2, 32], strides = [1, 1]} : vector<2x128xf32> to vector<2x32xf32>
    %138 = arith.mulf %131, %113 : vector<2x32xf32>
    %139 = arith.mulf %130, %136 : vector<2x32xf32>
    %140 = arith.addf %138, %139 : vector<2x32xf32>
    %141 = math.tanh %140 : vector<2x32xf32>
    %142 = arith.mulf %137, %141 : vector<2x32xf32>
    %143 = vector.extract_strided_slice %4 {offsets = [8, 0], sizes = [2, 1], strides = [1, 1]} : vector<16x1xi32> to vector<2x1xi32>
    %c0_i32_32 = arith.constant 0 : i32
    %144 = vector.broadcast %c0_i32_32 : i32 to vector<2x1xi32>
    %145 = arith.cmpi ne, %143, %144 : vector<2x1xi32>
    %146 = vector.shape_cast %145 : vector<2x1xi1> to vector<2x1xi1>
    %147 = vector.broadcast %146 : vector<2x1xi1> to vector<2x32xi1>
    %148 = arith.select %147, %142, %121 : vector<2x32xi1>, vector<2x32xf32>
    %149 = vector.extract_strided_slice %10 {offsets = [10, 0], sizes = [2, 128], strides = [1, 1]} : vector<16x128xf32> to vector<2x128xf32>
    %cst_33 = arith.constant dense<0.000000e+00> : vector<2x128xf32>
    %150 = tpu.matmul %142, %1, %cst_33 {dimension_numbers = #tpu.dot_dimension_numbers<[1], [0], [0], [1], [0, 0, 1, 1], [], []>, precision = #tpu.contract_precision<fp32>} : vector<2x32xf32>, vector<32x128xf32>, vector<2x128xf32> -> vector<2x128xf32>
    %151 = arith.addf %149, %150 : vector<2x128xf32>
    %152 = arith.negf %151 : vector<2x128xf32>
    %153 = math.exp %152 : vector<2x128xf32>
    %cst_34 = arith.constant 1.000000e+00 : f32
    %154 = vector.broadcast %cst_34 : f32 to vector<2x128xf32>
    %155 = arith.addf %154, %153 : vector<2x128xf32>
    %156 = arith.divf %154, %155 : vector<2x128xf32>
    %157 = vector.extract_strided_slice %156 {offsets = [0, 0], sizes = [2, 32], strides = [1, 1]} : vector<2x128xf32> to vector<2x32xf32>
    %158 = vector.extract_strided_slice %156 {offsets = [0, 32], sizes = [2, 32], strides = [1, 1]} : vector<2x128xf32> to vector<2x32xf32>
    %159 = vector.extract_strided_slice %156 {offsets = [0, 64], sizes = [2, 32], strides = [1, 1]} : vector<2x128xf32> to vector<2x32xf32>
    %cst_35 = arith.constant 2.000000e+00 : f32
    %160 = vector.broadcast %cst_35 : f32 to vector<2x32xf32>
    %161 = arith.mulf %160, %159 : vector<2x32xf32>
    %cst_36 = arith.constant 1.000000e+00 : f32
    %162 = vector.broadcast %cst_36 : f32 to vector<2x32xf32>
    %163 = arith.subf %161, %162 : vector<2x32xf32>
    %164 = vector.extract_strided_slice %156 {offsets = [0, 96], sizes = [2, 32], strides = [1, 1]} : vector<2x128xf32> to vector<2x32xf32>
    %165 = arith.mulf %158, %140 : vector<2x32xf32>
    %166 = arith.mulf %157, %163 : vector<2x32xf32>
    %167 = arith.addf %165, %166 : vector<2x32xf32>
    %168 = math.tanh %167 : vector<2x32xf32>
    %169 = arith.mulf %164, %168 : vector<2x32xf32>
    %170 = vector.extract_strided_slice %4 {offsets = [10, 0], sizes = [2, 1], strides = [1, 1]} : vector<16x1xi32> to vector<2x1xi32>
    %c0_i32_37 = arith.constant 0 : i32
    %171 = vector.broadcast %c0_i32_37 : i32 to vector<2x1xi32>
    %172 = arith.cmpi ne, %170, %171 : vector<2x1xi32>
    %173 = vector.shape_cast %172 : vector<2x1xi1> to vector<2x1xi1>
    %174 = vector.broadcast %173 : vector<2x1xi1> to vector<2x32xi1>
    %175 = arith.select %174, %169, %148 : vector<2x32xi1>, vector<2x32xf32>
    %176 = vector.extract_strided_slice %10 {offsets = [12, 0], sizes = [2, 128], strides = [1, 1]} : vector<16x128xf32> to vector<2x128xf32>
    %cst_38 = arith.constant dense<0.000000e+00> : vector<2x128xf32>
    %177 = tpu.matmul %169, %1, %cst_38 {dimension_numbers = #tpu.dot_dimension_numbers<[1], [0], [0], [1], [0, 0, 1, 1], [], []>, precision = #tpu.contract_precision<fp32>} : vector<2x32xf32>, vector<32x128xf32>, vector<2x128xf32> -> vector<2x128xf32>
    %178 = arith.addf %176, %177 : vector<2x128xf32>
    %179 = arith.negf %178 : vector<2x128xf32>
    %180 = math.exp %179 : vector<2x128xf32>
    %cst_39 = arith.constant 1.000000e+00 : f32
    %181 = vector.broadcast %cst_39 : f32 to vector<2x128xf32>
    %182 = arith.addf %181, %180 : vector<2x128xf32>
    %183 = arith.divf %181, %182 : vector<2x128xf32>
    %184 = vector.extract_strided_slice %183 {offsets = [0, 0], sizes = [2, 32], strides = [1, 1]} : vector<2x128xf32> to vector<2x32xf32>
    %185 = vector.extract_strided_slice %183 {offsets = [0, 32], sizes = [2, 32], strides = [1, 1]} : vector<2x128xf32> to vector<2x32xf32>
    %186 = vector.extract_strided_slice %183 {offsets = [0, 64], sizes = [2, 32], strides = [1, 1]} : vector<2x128xf32> to vector<2x32xf32>
    %cst_40 = arith.constant 2.000000e+00 : f32
    %187 = vector.broadcast %cst_40 : f32 to vector<2x32xf32>
    %188 = arith.mulf %187, %186 : vector<2x32xf32>
    %cst_41 = arith.constant 1.000000e+00 : f32
    %189 = vector.broadcast %cst_41 : f32 to vector<2x32xf32>
    %190 = arith.subf %188, %189 : vector<2x32xf32>
    %191 = vector.extract_strided_slice %183 {offsets = [0, 96], sizes = [2, 32], strides = [1, 1]} : vector<2x128xf32> to vector<2x32xf32>
    %192 = arith.mulf %185, %167 : vector<2x32xf32>
    %193 = arith.mulf %184, %190 : vector<2x32xf32>
    %194 = arith.addf %192, %193 : vector<2x32xf32>
    %195 = math.tanh %194 : vector<2x32xf32>
    %196 = arith.mulf %191, %195 : vector<2x32xf32>
    %197 = vector.extract_strided_slice %4 {offsets = [12, 0], sizes = [2, 1], strides = [1, 1]} : vector<16x1xi32> to vector<2x1xi32>
    %c0_i32_42 = arith.constant 0 : i32
    %198 = vector.broadcast %c0_i32_42 : i32 to vector<2x1xi32>
    %199 = arith.cmpi ne, %197, %198 : vector<2x1xi32>
    %200 = vector.shape_cast %199 : vector<2x1xi1> to vector<2x1xi1>
    %201 = vector.broadcast %200 : vector<2x1xi1> to vector<2x32xi1>
    %202 = arith.select %201, %196, %175 : vector<2x32xi1>, vector<2x32xf32>
    %203 = vector.extract_strided_slice %10 {offsets = [14, 0], sizes = [2, 128], strides = [1, 1]} : vector<16x128xf32> to vector<2x128xf32>
    %cst_43 = arith.constant dense<0.000000e+00> : vector<2x128xf32>
    %204 = tpu.matmul %196, %1, %cst_43 {dimension_numbers = #tpu.dot_dimension_numbers<[1], [0], [0], [1], [0, 0, 1, 1], [], []>, precision = #tpu.contract_precision<fp32>} : vector<2x32xf32>, vector<32x128xf32>, vector<2x128xf32> -> vector<2x128xf32>
    %205 = arith.addf %203, %204 : vector<2x128xf32>
    %206 = arith.negf %205 : vector<2x128xf32>
    %207 = math.exp %206 : vector<2x128xf32>
    %cst_44 = arith.constant 1.000000e+00 : f32
    %208 = vector.broadcast %cst_44 : f32 to vector<2x128xf32>
    %209 = arith.addf %208, %207 : vector<2x128xf32>
    %210 = arith.divf %208, %209 : vector<2x128xf32>
    %211 = vector.extract_strided_slice %210 {offsets = [0, 0], sizes = [2, 32], strides = [1, 1]} : vector<2x128xf32> to vector<2x32xf32>
    %212 = vector.extract_strided_slice %210 {offsets = [0, 32], sizes = [2, 32], strides = [1, 1]} : vector<2x128xf32> to vector<2x32xf32>
    %213 = vector.extract_strided_slice %210 {offsets = [0, 64], sizes = [2, 32], strides = [1, 1]} : vector<2x128xf32> to vector<2x32xf32>
    %cst_45 = arith.constant 2.000000e+00 : f32
    %214 = vector.broadcast %cst_45 : f32 to vector<2x32xf32>
    %215 = arith.mulf %214, %213 : vector<2x32xf32>
    %cst_46 = arith.constant 1.000000e+00 : f32
    %216 = vector.broadcast %cst_46 : f32 to vector<2x32xf32>
    %217 = arith.subf %215, %216 : vector<2x32xf32>
    %218 = vector.extract_strided_slice %210 {offsets = [0, 96], sizes = [2, 32], strides = [1, 1]} : vector<2x128xf32> to vector<2x32xf32>
    %219 = arith.mulf %212, %194 : vector<2x32xf32>
    %220 = arith.mulf %211, %217 : vector<2x32xf32>
    %221 = arith.addf %219, %220 : vector<2x32xf32>
    %222 = math.tanh %221 : vector<2x32xf32>
    %223 = arith.mulf %218, %222 : vector<2x32xf32>
    %224 = vector.extract_strided_slice %4 {offsets = [14, 0], sizes = [2, 1], strides = [1, 1]} : vector<16x1xi32> to vector<2x1xi32>
    %c0_i32_47 = arith.constant 0 : i32
    %225 = vector.broadcast %c0_i32_47 : i32 to vector<2x1xi32>
    %226 = arith.cmpi ne, %224, %225 : vector<2x1xi32>
    %227 = vector.shape_cast %226 : vector<2x1xi1> to vector<2x1xi1>
    %228 = vector.broadcast %227 : vector<2x1xi1> to vector<2x32xi1>
    %229 = arith.select %228, %223, %202 : vector<2x32xi1>, vector<2x32xf32>
    %cst_48 = arith.constant dense<0.000000e+00> : vector<2x128xf32>
    %230 = tpu.matmul %229, %2, %cst_48 {dimension_numbers = #tpu.dot_dimension_numbers<[1], [0], [0], [1], [0, 0, 1, 1], [], []>, precision = #tpu.contract_precision<fp32>} : vector<2x32xf32>, vector<32x128xf32>, vector<2x128xf32> -> vector<2x128xf32>
    %231 = vector.broadcast %3 : vector<1x128xf32> to vector<2x128xf32>
    %232 = arith.addf %230, %231 : vector<2x128xf32>
    %233 = vector.extract_strided_slice %232 {offsets = [0, 0], sizes = [2, 5], strides = [1, 1]} : vector<2x128xf32> to vector<2x5xf32>
    %c0_49 = arith.constant 0 : index
    %c0_50 = arith.constant 0 : index
    %234 = vector.load %arg2[%c0_49, %c0_50] : memref<2x5xf32, #tpu.memory_space<vmem>>, vector<2x5xf32>
    tpu.vector_store %arg2[%c0_49, %c0_50], %233 {strides = array<i32>} : memref<2x5xf32, #tpu.memory_space<vmem>>, vector<2x5xf32>,
    return
  }
}

</mosaic_0001>

<llo_original>
// kernel: _lambda_.1
$region0: #{_lambda_.1}
  #allocation0 [shape = 'u32[]', space=smem, size = 0x4, offset = 0x4, fixed_abs, tag = 'smem constant byte address 0x4 - core index']
  #allocation1 [shape = 'u32[72,128]{1,0:T(1,128)}', space=vmem, size = 0x9000, scoped, tag = 'internal scratch']
  %s0 = inlined_call_operand.vmem [shape: s32[16,1], index: 0, kind: input, shape index: {}]
  %s1 = inlined_call_operand.hbm [shape: f32[104,128], index: 1, kind: input, shape index: {}]
  %s2 = inlined_call_operand.hbm [shape: f32[2,5], index: 2, kind: output, shape index: {}]
  %s3 = sld [smem:[#allocation0]]
  $region22: #{_lambda_.1} parent=0
    _
  %s5 = ssub.s32 1, %s3
  %s6 = scalar_select 0, %s5, %s3
  $region1: #{_lambda_.1} parent=0
    #allocation2 [shape = 'u8[53248]{0}', space=vmem, size = 0xd000, scoped, tag = 'input window, operand 1, single buffered']
    #allocation3 [shape = 's32[1]{0}', space=sflag, size = 0x4, scoped, tag = 'scoped memory for _lambda_.1']
    #allocation4 [shape = 's32[1]{0}', space=sflag, size = 0x4, scoped, tag = 'scoped memory for _lambda_.1']
    #allocation5 [shape = 'u8[1024]{0}', space=vmem, size = 0x400, scoped, tag = 'output window, operand 0, single buffered']
    %7 = vsyncpa [#allocation3], 0
    %8 = vsyncpa [#allocation4], 0
    // Predicated region
    $region2: #{_lambda_.1} parent=1 // pred_check
      _
    $region3: #{_lambda_.1} parent=1 // pred_check_branch
      %10 = sbr.rel (0) target = $region5
    $region4: #{_lambda_.1} parent=1 // pred_region
      _
    $region5: #{_lambda_.1} parent=1 // pred_fallthru
      _
    // Predicated region
    $region6: #{_lambda_.1} parent=1 // pred_check
      _
    $region7: #{_lambda_.1} parent=1 // pred_check_branch
      %12 = sbr.rel (0) target = $region9
    $region8: #{_lambda_.1} parent=1 // pred_region
      %14 = vsyncadd [#allocation3], 0
      %s15 = sshll.u32 %s1, 4
      %s16 = int_to_ptr.hbm [resolvable:$true] %s15
      %s17 = sshll.u32 [#allocation2], 4
      %s18 = int_to_ptr.vmem [resolvable:$true] %s17
      %23 = dma.hbm_to_vmem [thread:$0]  %s16, 1664, %s18, [#allocation3], 128, 128, 8
    $region9: #{_lambda_.1} parent=1 // pred_fallthru
      _
    // Predicated region
    $region10: #{_lambda_.1} parent=1 // pred_check
      _
    $region11: #{_lambda_.1} parent=1 // pred_check_branch
      %25 = sbr.rel (0) target = $region13
    $region12: #{_lambda_.1} parent=1 // pred_region
      %27 = dma.done [#allocation3], 1664
    $region13: #{_lambda_.1} parent=1 // pred_fallthru
      _
    %v28 = vld [vmem:[#allocation2] sm:$0xff]
    %v29 = vld [vmem:[#allocation2 + $0x8] sm:$0xff]
    %v30 = vld [vmem:[#allocation2 + $0x10] sm:$0xff]
    %v31 = vld [vmem:[#allocation2 + $0x18] sm:$0xff]
    %v32 = vld [vmem:[#allocation2 + $0x20] sm:$0xff]
    %v33 = vld [vmem:[#allocation2 + $0x28] sm:$0xff]
    %v34 = vld [vmem:[#allocation2 + $0x30] sm:$0xff]
    %v35 = vld [vmem:[#allocation2 + $0x38] sm:$0xff]
    %v36 = vld [vmem:[#allocation2 + $0x40] sm:$0xff]
    %v37 = vld [vmem:[#allocation2 + $0x48] sm:$0xff]
    %v38 = vld [vmem:[#allocation2 + $0x50] sm:$0xff]
    %v39 = vld [vmem:[#allocation2 + $0x58] sm:$0xff]
    %v40 = vld [vmem:[#allocation2 + $0x60] sm:$0x1]
    %v41 = vld [vmem:[%s0] sm:$0xff]
    %v42 = vld [vmem:[%s0 + $0x8] sm:$0xff]
    %v43 = vlaneseq
    %v44 = vand.u32 %v43, 127
    %45 = vset.pattern.permute.xlu0 0
    %46 = vperm.xlu0 %45, %v41
    %v47 = vpop.permute.xlu0 %46
    %48 = vset.pattern.permute.xlu0 0
    %49 = vperm.xlu0 %48, %v42
    %v50 = vpop.permute.xlu0 %49
    %vm51 = vcmp.eq.s32.totalorder %v47, %v44
    %vm52 = vcmp.eq.s32.totalorder %v50, %v44
    %v53 = vsel %vm51, 1, 0
    %v54 = vsel %vm52, 1, 0
    %v55 = vcvt.s32.f32 %v53
    %v56 = vcvt.s32.f32 %v54
    %vm57 = vcmask 261120
    %v59 = vsel %vm57, %v55, 0
    %v62 = vsel %vm57, %v56, 0
    %64 = vmatpush.msra.mxu0 0.0
    %65 = vmatpush.msra.mxu0 0.0
    %66 = vmatpush.msra.mxu0 0.0
    %67 = vmatpush.msra.mxu0 0.0
    %68 = vmatpush.msra.mxu0 0.0
    %69 = vmatpush.msra.mxu0 0.0
    %70 = vmatpush.msra.mxu0 0.0
    %71 = vmatpush.msra.mxu0 0.0
    %72 = vmatpush.msra.mxu0 0.0
    %73 = vmatpush.msra.mxu0 0.0
    %74 = vmatpush.msra.mxu0 0.0
    %75 = vmatpush.msra.mxu0 0.0
    %v76 = vand.u32 %v31, 4294901760
    %77 = vmatpush.msra.mxu0 %v76
    %v78 = vand.u32 %v30, 4294901760
    %79 = vmatpush.msra.mxu0 %v78
    %v80 = vand.u32 %v29, 4294901760
    %81 = vmatpush.msra.mxu0 %v80
    %v82 = vand.u32 %v28, 4294901760
    %83 = vmatpush.msra.mxu0 %v82
    %v84 = vand.u32 %v59, 4294901760
    %v85 = vsub.f32 %v59, %v84
    %v86 = vand.u32 %v85, 4294901760
    %v87 = vsub.f32 %v85, %v86
    %v88 = vand.u32 %v87, 4294901760
    %89 = vmatmul.f32.gmra.mxu0 %v88
    %v90 = vpop.f32.mrf.mxu0
    %v91 = vadd.f32 0.0, %v90
    %v92 = vand.u32 %v62, 4294901760
    %v93 = vsub.f32 %v62, %v92
    %v94 = vand.u32 %v93, 4294901760
    %v95 = vsub.f32 %v93, %v94
    %v96 = vand.u32 %v95, 4294901760
    %97 = vmatmul.f32.gmra.mxu0 %v96
    %v98 = vpop.f32.mrf.mxu0
    %v99 = vadd.f32 0.0, %v98
    %100 = vdwg.mxu0
    %101 = vmatpush.msra.mxu0 0.0
    %102 = vmatpush.msra.mxu0 0.0
    %103 = vmatpush.msra.mxu0 0.0
    %104 = vmatpush.msra.mxu0 0.0
    %105 = vmatpush.msra.mxu0 0.0
    %106 = vmatpush.msra.mxu0 0.0
    %107 = vmatpush.msra.mxu0 0.0
    %108 = vmatpush.msra.mxu0 0.0
    %109 = vmatpush.msra.mxu0 0.0
    %110 = vmatpush.msra.mxu0 0.0
    %111 = vmatpush.msra.mxu0 0.0
    %112 = vmatpush.msra.mxu0 0.0
    %v113 = vand.u32 %v31, 4294901760
    %v114 = vsub.f32 %v31, %v113
    %v115 = vand.u32 %v114, 4294901760
    %v116 = vsub.f32 %v114, %v115
    %v117 = vand.u32 %v116, 4294901760
    %118 = vmatpush.msra.mxu0 %v117
    %v119 = vand.u32 %v30, 4294901760
    %v120 = vsub.f32 %v30, %v119
    %v121 = vand.u32 %v120, 4294901760
    %v122 = vsub.f32 %v120, %v121
    %v123 = vand.u32 %v122, 4294901760
    %124 = vmatpush.msra.mxu0 %v123
    %v125 = vand.u32 %v29, 4294901760
    %v126 = vsub.f32 %v29, %v125
    %v127 = vand.u32 %v126, 4294901760
    %v128 = vsub.f32 %v126, %v127
    %v129 = vand.u32 %v128, 4294901760
    %130 = vmatpush.msra.mxu0 %v129
    %v131 = vand.u32 %v28, 4294901760
    %v132 = vsub.f32 %v28, %v131
    %v133 = vand.u32 %v132, 4294901760
    %v134 = vsub.f32 %v132, %v133
    %v135 = vand.u32 %v134, 4294901760
    %136 = vmatpush.msra.mxu0 %v135
    %v137 = vand.u32 %v59, 4294901760
    %138 = vmatmul.f32.gmra.mxu0 %v137
    %v139 = vpop.f32.mrf.mxu0
    %v140 = vadd.f32 %v91, %v139
    %v141 = vand.u32 %v62, 4294901760
    %142 = vmatmul.f32.gmra.mxu0 %v141
    %v143 = vpop.f32.mrf.mxu0
    %v144 = vadd.f32 %v99, %v143
    %145 = vdwg.mxu0
    %146 = vmatpush.msra.mxu0 0.0
    %147 = vmatpush.msra.mxu0 0.0
    %148 = vmatpush.msra.mxu0 0.0
    %149 = vmatpush.msra.mxu0 0.0
    %150 = vmatpush.msra.mxu0 0.0
    %151 = vmatpush.msra.mxu0 0.0
    %152 = vmatpush.msra.mxu0 0.0
    %153 = vmatpush.msra.mxu0 0.0
    %154 = vmatpush.msra.mxu0 0.0
    %155 = vmatpush.msra.mxu0 0.0
    %156 = vmatpush.msra.mxu0 0.0
    %157 = vmatpush.msra.mxu0 0.0
    %v158 = vand.u32 %v31, 4294901760
    %v159 = vsub.f32 %v31, %v158
    %160 = vmatpush.msra.mxu0 %v159
    %v161 = vand.u32 %v30, 4294901760
    %v162 = vsub.f32 %v30, %v161
    %163 = vmatpush.msra.mxu0 %v162
    %v164 = vand.u32 %v29, 4294901760
    %v165 = vsub.f32 %v29, %v164
    %166 = vmatpush.msra.mxu0 %v165
    %v167 = vand.u32 %v28, 4294901760
    %v168 = vsub.f32 %v28, %v167
    %169 = vmatpush.msra.mxu0 %v168
    %v170 = vand.u32 %v59, 4294901760
    %v171 = vsub.f32 %v59, %v170
    %172 = vmatmul.f32.gmra.mxu0 %v171
    %v173 = vpop.f32.mrf.mxu0
    %v174 = vadd.f32 %v140, %v173
    %v175 = vand.u32 %v62, 4294901760
    %v176 = vsub.f32 %v62, %v175
    %177 = vmatmul.f32.gmra.mxu0 %v176
    %v178 = vpop.f32.mrf.mxu0
    %v179 = vadd.f32 %v144, %v178
    %180 = vdwg.mxu0
    %181 = vmatpush.msra.mxu0 0.0
    %182 = vmatpush.msra.mxu0 0.0
    %183 = vmatpush.msra.mxu0 0.0
    %184 = vmatpush.msra.mxu0 0.0
    %185 = vmatpush.msra.mxu0 0.0
    %186 = vmatpush.msra.mxu0 0.0
    %187 = vmatpush.msra.mxu0 0.0
    %188 = vmatpush.msra.mxu0 0.0
    %189 = vmatpush.msra.mxu0 0.0
    %190 = vmatpush.msra.mxu0 0.0
    %191 = vmatpush.msra.mxu0 0.0
    %192 = vmatpush.msra.mxu0 0.0
    %v193 = vand.u32 %v31, 4294901760
    %194 = vmatpush.msra.mxu0 %v193
    %v195 = vand.u32 %v30, 4294901760
    %196 = vmatpush.msra.mxu0 %v195
    %v197 = vand.u32 %v29, 4294901760
    %198 = vmatpush.msra.mxu0 %v197
    %v199 = vand.u32 %v28, 4294901760
    %200 = vmatpush.msra.mxu0 %v199
    %v201 = vand.u32 %v59, 4294901760
    %v202 = vsub.f32 %v59, %v201
    %v203 = vand.u32 %v202, 4294901760
    %204 = vmatmul.f32.gmra.mxu0 %v203
    %v205 = vpop.f32.mrf.mxu0
    %v206 = vadd.f32 %v174, %v205
    %v207 = vand.u32 %v62, 4294901760
    %v208 = vsub.f32 %v62, %v207
    %v209 = vand.u32 %v208, 4294901760
    %210 = vmatmul.f32.gmra.mxu0 %v209
    %v211 = vpop.f32.mrf.mxu0
    %v212 = vadd.f32 %v179, %v211
    %213 = vdwg.mxu0
    %214 = vmatpush.msra.mxu0 0.0
    %215 = vmatpush.msra.mxu0 0.0
    %216 = vmatpush.msra.mxu0 0.0
    %217 = vmatpush.msra.mxu0 0.0
    %218 = vmatpush.msra.mxu0 0.0
    %219 = vmatpush.msra.mxu0 0.0
    %220 = vmatpush.msra.mxu0 0.0
    %221 = vmatpush.msra.mxu0 0.0
    %222 = vmatpush.msra.mxu0 0.0
    %223 = vmatpush.msra.mxu0 0.0
    %224 = vmatpush.msra.mxu0 0.0
    %225 = vmatpush.msra.mxu0 0.0
    %v226 = vand.u32 %v31, 4294901760
    %v227 = vsub.f32 %v31, %v226
    %v228 = vand.u32 %v227, 4294901760
    %229 = vmatpush.msra.mxu0 %v228
    %v230 = vand.u32 %v30, 4294901760
    %v231 = vsub.f32 %v30, %v230
    %v232 = vand.u32 %v231, 4294901760
    %233 = vmatpush.msra.mxu0 %v232
    %v234 = vand.u32 %v29, 4294901760
    %v235 = vsub.f32 %v29, %v234
    %v236 = vand.u32 %v235, 4294901760
    %237 = vmatpush.msra.mxu0 %v236
    %v238 = vand.u32 %v28, 4294901760
    %v239 = vsub.f32 %v28, %v238
    %v240 = vand.u32 %v239, 4294901760
    %241 = vmatpush.msra.mxu0 %v240
    %v242 = vand.u32 %v59, 4294901760
    %243 = vmatmul.f32.gmra.mxu0 %v242
    %v244 = vpop.f32.mrf.mxu0
    %v245 = vadd.f32 %v206, %v244
    %v246 = vand.u32 %v62, 4294901760
    %247 = vmatmul.f32.gmra.mxu0 %v246
    %v248 = vpop.f32.mrf.mxu0
    %v249 = vadd.f32 %v212, %v248
    %250 = vdwg.mxu0
    %251 = vmatpush.msra.mxu0 0.0
    %252 = vmatpush.msra.mxu0 0.0
    %253 = vmatpush.msra.mxu0 0.0
    %254 = vmatpush.msra.mxu0 0.0
    %255 = vmatpush.msra.mxu0 0.0
    %256 = vmatpush.msra.mxu0 0.0
    %257 = vmatpush.msra.mxu0 0.0
    %258 = vmatpush.msra.mxu0 0.0
    %259 = vmatpush.msra.mxu0 0.0
    %260 = vmatpush.msra.mxu0 0.0
    %261 = vmatpush.msra.mxu0 0.0
    %262 = vmatpush.msra.mxu0 0.0
    %v263 = vand.u32 %v31, 4294901760
    %264 = vmatpush.msra.mxu0 %v263
    %v265 = vand.u32 %v30, 4294901760
    %266 = vmatpush.msra.mxu0 %v265
    %v267 = vand.u32 %v29, 4294901760
    %268 = vmatpush.msra.mxu0 %v267
    %v269 = vand.u32 %v28, 4294901760
    %270 = vmatpush.msra.mxu0 %v269
    %v271 = vand.u32 %v59, 4294901760
    %272 = vmatmul.f32.gmra.mxu0 %v271
    %v273 = vpop.f32.mrf.mxu0
    %v274 = vadd.f32 %v245, %v273
    %v275 = vand.u32 %v62, 4294901760
    %276 = vmatmul.f32.gmra.mxu0 %v275
    %v277 = vpop.f32.mrf.mxu0
    %v278 = vadd.f32 %v249, %v277
    %279 = vdwg.mxu0
    %v281 = vsel %vm57, 0.0, 0
    %283 = vmatpush.msra.mxu0 0.0
    %284 = vmatpush.msra.mxu0 0.0
    %285 = vmatpush.msra.mxu0 0.0
    %286 = vmatpush.msra.mxu0 0.0
    %287 = vmatpush.msra.mxu0 0.0
    %288 = vmatpush.msra.mxu0 0.0
    %289 = vmatpush.msra.mxu0 0.0
    %290 = vmatpush.msra.mxu0 0.0
    %291 = vmatpush.msra.mxu0 0.0
    %292 = vmatpush.msra.mxu0 0.0
    %293 = vmatpush.msra.mxu0 0.0
    %294 = vmatpush.msra.mxu0 0.0
    %v295 = vand.u32 %v35, 4294901760
    %296 = vmatpush.msra.mxu0 %v295
    %v297 = vand.u32 %v34, 4294901760
    %298 = vmatpush.msra.mxu0 %v297
    %v299 = vand.u32 %v33, 4294901760
    %300 = vmatpush.msra.mxu0 %v299
    %v301 = vand.u32 %v32, 4294901760
    %302 = vmatpush.msra.mxu0 %v301
    %v303 = vand.u32 %v281, 4294901760
    %v304 = vsub.f32 %v281, %v303
    %v305 = vand.u32 %v304, 4294901760
    %v306 = vsub.f32 %v304, %v305
    %v307 = vand.u32 %v306, 4294901760
    %308 = vmatmul.f32.gmra.mxu0 %v307
    %v309 = vpop.f32.mrf.mxu0
    %v310 = vadd.f32 0.0, %v309
    %311 = vdwg.mxu0
    %312 = vmatpush.msra.mxu0 0.0
    %313 = vmatpush.msra.mxu0 0.0
    %314 = vmatpush.msra.mxu0 0.0
    %315 = vmatpush.msra.mxu0 0.0
    %316 = vmatpush.msra.mxu0 0.0
    %317 = vmatpush.msra.mxu0 0.0
    %318 = vmatpush.msra.mxu0 0.0
    %319 = vmatpush.msra.mxu0 0.0
    %320 = vmatpush.msra.mxu0 0.0
    %321 = vmatpush.msra.mxu0 0.0
    %322 = vmatpush.msra.mxu0 0.0
    %323 = vmatpush.msra.mxu0 0.0
    %v324 = vand.u32 %v35, 4294901760
    %v325 = vsub.f32 %v35, %v324
    %v326 = vand.u32 %v325, 4294901760
    %v327 = vsub.f32 %v325, %v326
    %v328 = vand.u32 %v327, 4294901760
    %329 = vmatpush.msra.mxu0 %v328
    %v330 = vand.u32 %v34, 4294901760
    %v331 = vsub.f32 %v34, %v330
    %v332 = vand.u32 %v331, 4294901760
    %v333 = vsub.f32 %v331, %v332
    %v334 = vand.u32 %v333, 4294901760
    %335 = vmatpush.msra.mxu0 %v334
    %v336 = vand.u32 %v33, 4294901760
    %v337 = vsub.f32 %v33, %v336
    %v338 = vand.u32 %v337, 4294901760
    %v339 = vsub.f32 %v337, %v338
    %v340 = vand.u32 %v339, 4294901760
    %341 = vmatpush.msra.mxu0 %v340
    %v342 = vand.u32 %v32, 4294901760
    %v343 = vsub.f32 %v32, %v342
    %v344 = vand.u32 %v343, 4294901760
    %v345 = vsub.f32 %v343, %v344
    %v346 = vand.u32 %v345, 4294901760
    %347 = vmatpush.msra.mxu0 %v346
    %v348 = vand.u32 %v281, 4294901760
    %349 = vmatmul.f32.gmra.mxu0 %v348
    %v350 = vpop.f32.mrf.mxu0
    %v351 = vadd.f32 %v310, %v350
    %352 = vdwg.mxu0
    %353 = vmatpush.msra.mxu0 0.0
    %354 = vmatpush.msra.mxu0 0.0
    %355 = vmatpush.msra.mxu0 0.0
    %356 = vmatpush.msra.mxu0 0.0
    %357 = vmatpush.msra.mxu0 0.0
    %358 = vmatpush.msra.mxu0 0.0
    %359 = vmatpush.msra.mxu0 0.0
    %360 = vmatpush.msra.mxu0 0.0
    %361 = vmatpush.msra.mxu0 0.0
    %362 = vmatpush.msra.mxu0 0.0
    %363 = vmatpush.msra.mxu0 0.0
    %364 = vmatpush.msra.mxu0 0.0
    %v365 = vand.u32 %v35, 4294901760
    %v366 = vsub.f32 %v35, %v365
    %367 = vmatpush.msra.mxu0 %v366
    %v368 = vand.u32 %v34, 4294901760
    %v369 = vsub.f32 %v34, %v368
    %370 = vmatpush.msra.mxu0 %v369
    %v371 = vand.u32 %v33, 4294901760
    %v372 = vsub.f32 %v33, %v371
    %373 = vmatpush.msra.mxu0 %v372
    %v374 = vand.u32 %v32, 4294901760
    %v375 = vsub.f32 %v32, %v374
    %376 = vmatpush.msra.mxu0 %v375
    %v377 = vand.u32 %v281, 4294901760
    %v378 = vsub.f32 %v281, %v377
    %379 = vmatmul.f32.gmra.mxu0 %v378
    %v380 = vpop.f32.mrf.mxu0
    %v381 = vadd.f32 %v351, %v380
    %382 = vdwg.mxu0
    %383 = vmatpush.msra.mxu0 0.0
    %384 = vmatpush.msra.mxu0 0.0
    %385 = vmatpush.msra.mxu0 0.0
    %386 = vmatpush.msra.mxu0 0.0
    %387 = vmatpush.msra.mxu0 0.0
    %388 = vmatpush.msra.mxu0 0.0
    %389 = vmatpush.msra.mxu0 0.0
    %390 = vmatpush.msra.mxu0 0.0
    %391 = vmatpush.msra.mxu0 0.0
    %392 = vmatpush.msra.mxu0 0.0
    %393 = vmatpush.msra.mxu0 0.0
    %394 = vmatpush.msra.mxu0 0.0
    %v395 = vand.u32 %v35, 4294901760
    %396 = vmatpush.msra.mxu0 %v395
    %v397 = vand.u32 %v34, 4294901760
    %398 = vmatpush.msra.mxu0 %v397
    %v399 = vand.u32 %v33, 4294901760
    %400 = vmatpush.msra.mxu0 %v399
    %v401 = vand.u32 %v32, 4294901760
    %402 = vmatpush.msra.mxu0 %v401
    %v403 = vand.u32 %v281, 4294901760
    %v404 = vsub.f32 %v281, %v403
    %v405 = vand.u32 %v404, 4294901760
    %406 = vmatmul.f32.gmra.mxu0 %v405
    %v407 = vpop.f32.mrf.mxu0
    %v408 = vadd.f32 %v381, %v407
    %409 = vdwg.mxu0
    %410 = vmatpush.msra.mxu0 0.0
    %411 = vmatpush.msra.mxu0 0.0
    %412 = vmatpush.msra.mxu0 0.0
    %413 = vmatpush.msra.mxu0 0.0
    %414 = vmatpush.msra.mxu0 0.0
    %415 = vmatpush.msra.mxu0 0.0
    %416 = vmatpush.msra.mxu0 0.0
    %417 = vmatpush.msra.mxu0 0.0
    %418 = vmatpush.msra.mxu0 0.0
    %419 = vmatpush.msra.mxu0 0.0
    %420 = vmatpush.msra.mxu0 0.0
    %421 = vmatpush.msra.mxu0 0.0
    %v422 = vand.u32 %v35, 4294901760
    %v423 = vsub.f32 %v35, %v422
    %v424 = vand.u32 %v423, 4294901760
    %425 = vmatpush.msra.mxu0 %v424
    %v426 = vand.u32 %v34, 4294901760
    %v427 = vsub.f32 %v34, %v426
    %v428 = vand.u32 %v427, 4294901760
    %429 = vmatpush.msra.mxu0 %v428
    %v430 = vand.u32 %v33, 4294901760
    %v431 = vsub.f32 %v33, %v430
    %v432 = vand.u32 %v431, 4294901760
    %433 = vmatpush.msra.mxu0 %v432
    %v434 = vand.u32 %v32, 4294901760
    %v435 = vsub.f32 %v32, %v434
    %v436 = vand.u32 %v435, 4294901760
    %437 = vmatpush.msra.mxu0 %v436
    %v438 = vand.u32 %v281, 4294901760
    %439 = vmatmul.f32.gmra.mxu0 %v438
    %v440 = vpop.f32.mrf.mxu0
    %v441 = vadd.f32 %v408, %v440
    %442 = vdwg.mxu0
    %443 = vmatpush.msra.mxu0 0.0
    %444 = vmatpush.msra.mxu0 0.0
    %445 = vmatpush.msra.mxu0 0.0
    %446 = vmatpush.msra.mxu0 0.0
    %447 = vmatpush.msra.mxu0 0.0
    %448 = vmatpush.msra.mxu0 0.0
    %449 = vmatpush.msra.mxu0 0.0
    %450 = vmatpush.msra.mxu0 0.0
    %451 = vmatpush.msra.mxu0 0.0
    %452 = vmatpush.msra.mxu0 0.0
    %453 = vmatpush.msra.mxu0 0.0
    %454 = vmatpush.msra.mxu0 0.0
    %v455 = vand.u32 %v35, 4294901760
    %456 = vmatpush.msra.mxu0 %v455
    %v457 = vand.u32 %v34, 4294901760
    %458 = vmatpush.msra.mxu0 %v457
    %v459 = vand.u32 %v33, 4294901760
    %460 = vmatpush.msra.mxu0 %v459
    %v461 = vand.u32 %v32, 4294901760
    %462 = vmatpush.msra.mxu0 %v461
    %v463 = vand.u32 %v281, 4294901760
    %464 = vmatmul.f32.gmra.mxu0 %v463
    %v465 = vpop.f32.mrf.mxu0
    %v466 = vadd.f32 %v441, %v465
    %467 = vdwg.mxu0
    %v468 = vadd.f32 %v274, %v466
    %v469 = vxor.u32 %v468, 2147483648
    %v470 = vmul.f32 %v469, 1.442695
    %v471 = vpow.pop %v470
    %v472 = vadd.f32 %v471, 1.0
    %v473 = vrcp.pop %v472
    %v474 = vmul.f32 %v472, %v473
    %v475 = vsub.f32 1.0, %v474
    %v476 = vmul.f32 %v473, %v475
    %v477 = vadd.f32 %v473, %v476
    %vm478 = vweird.f32 %v472
    %vm479 = vweird.f32 %v473
    %vm480 = vmor %vm478, %vm479
    %v481 = vsel %vm480, %v473, %v477
    %v482 = vand.u32 2147483647, %v472
    %vm483 = vcmp.eq.f32.partialorder %v482, 8.507059e+37
    %v484 = vand.u32 %v472, 2147483648
    %v485 = vor.u32 1.1754944e-38, %v484
    %v486 = vsel %vm483, %v485, %v481
    %v487 = vmul.f32 1.0, %v486
    %v488 = vmul.f32 %v487, 2.0
    %v489 = vsub.f32 %v488, 1.0
    %v490 = vmul.f32 %v487, 0.0
    %492 = vrot.lane.b32.xlu0 %v489, 64
    %v493 = vpop.permute.xlu0 %492
    %v495 = vmul.f32 %v487, %v493
    %497 = vrot.lane.b32.xlu0 %v495, 32
    %v498 = vpop.permute.xlu0 %497
    %v500 = vadd.f32 %v490, %v498
    %v501 = vtanh.pop %v500
    %503 = vrot.lane.b32.xlu0 %v501, 64
    %v504 = vpop.permute.xlu0 %503
    %v506 = vmul.f32 %v487, %v504
    %vm507 = vcmp.ne.s32.totalorder %v41, 0
    %v508 = vsel %vm507, 1, 0
    %509 = vset.pattern.permute.xlu0 0
    %510 = vperm.xlu0 %509, %v508
    %v511 = vpop.permute.xlu0 %510
    %vm512 = vcmp.eq.s32.totalorder %v511, 1
    %v513 = vsel %vm512, %v506, 0.0
    %515 = vrot.lane.b32.xlu0 %v506, 32
    %v516 = vpop.permute.xlu0 %515
    %v517 = vsel %vm57, %v516, 0
    %519 = vmatpush.msra.mxu0 0.0
    %520 = vmatpush.msra.mxu0 0.0
    %521 = vmatpush.msra.mxu0 0.0
    %522 = vmatpush.msra.mxu0 0.0
    %523 = vmatpush.msra.mxu0 0.0
    %524 = vmatpush.msra.mxu0 0.0
    %525 = vmatpush.msra.mxu0 0.0
    %526 = vmatpush.msra.mxu0 0.0
    %527 = vmatpush.msra.mxu0 0.0
    %528 = vmatpush.msra.mxu0 0.0
    %529 = vmatpush.msra.mxu0 0.0
    %530 = vmatpush.msra.mxu0 0.0
    %v531 = vand.u32 %v35, 4294901760
    %532 = vmatpush.msra.mxu0 %v531
    %v533 = vand.u32 %v34, 4294901760
    %534 = vmatpush.msra.mxu0 %v533
    %v535 = vand.u32 %v33, 4294901760
    %536 = vmatpush.msra.mxu0 %v535
    %v537 = vand.u32 %v32, 4294901760
    %538 = vmatpush.msra.mxu0 %v537
    %v539 = vand.u32 %v517, 4294901760
    %v540 = vsub.f32 %v517, %v539
    %v541 = vand.u32 %v540, 4294901760
    %v542 = vsub.f32 %v540, %v541
    %v543 = vand.u32 %v542, 4294901760
    %544 = vmatmul.f32.gmra.mxu0 %v543
    %v545 = vpop.f32.mrf.mxu0
    %v546 = vadd.f32 0.0, %v545
    %547 = vdwg.mxu0
    %548 = vmatpush.msra.mxu0 0.0
    %549 = vmatpush.msra.mxu0 0.0
    %550 = vmatpush.msra.mxu0 0.0
    %551 = vmatpush.msra.mxu0 0.0
    %552 = vmatpush.msra.mxu0 0.0
    %553 = vmatpush.msra.mxu0 0.0
    %554 = vmatpush.msra.mxu0 0.0
    %555 = vmatpush.msra.mxu0 0.0
    %556 = vmatpush.msra.mxu0 0.0
    %557 = vmatpush.msra.mxu0 0.0
    %558 = vmatpush.msra.mxu0 0.0
    %559 = vmatpush.msra.mxu0 0.0
    %v560 = vand.u32 %v35, 4294901760
    %v561 = vsub.f32 %v35, %v560
    %v562 = vand.u32 %v561, 4294901760
    %v563 = vsub.f32 %v561, %v562
    %v564 = vand.u32 %v563, 4294901760
    %565 = vmatpush.msra.mxu0 %v564
    %v566 = vand.u32 %v34, 4294901760
    %v567 = vsub.f32 %v34, %v566
    %v568 = vand.u32 %v567, 4294901760
    %v569 = vsub.f32 %v567, %v568
    %v570 = vand.u32 %v569, 4294901760
    %571 = vmatpush.msra.mxu0 %v570
    %v572 = vand.u32 %v33, 4294901760
    %v573 = vsub.f32 %v33, %v572
    %v574 = vand.u32 %v573, 4294901760
    %v575 = vsub.f32 %v573, %v574
    %v576 = vand.u32 %v575, 4294901760
    %577 = vmatpush.msra.mxu0 %v576
    %v578 = vand.u32 %v32, 4294901760
    %v579 = vsub.f32 %v32, %v578
    %v580 = vand.u32 %v579, 4294901760
    %v581 = vsub.f32 %v579, %v580
    %v582 = vand.u32 %v581, 4294901760
    %583 = vmatpush.msra.mxu0 %v582
    %v584 = vand.u32 %v517, 4294901760
    %585 = vmatmul.f32.gmra.mxu0 %v584
    %v586 = vpop.f32.mrf.mxu0
    %v587 = vadd.f32 %v546, %v586
    %588 = vdwg.mxu0
    %589 = vmatpush.msra.mxu0 0.0
    %590 = vmatpush.msra.mxu0 0.0
    %591 = vmatpush.msra.mxu0 0.0
    %592 = vmatpush.msra.mxu0 0.0
    %593 = vmatpush.msra.mxu0 0.0
    %594 = vmatpush.msra.mxu0 0.0
    %595 = vmatpush.msra.mxu0 0.0
    %596 = vmatpush.msra.mxu0 0.0
    %597 = vmatpush.msra.mxu0 0.0
    %598 = vmatpush.msra.mxu0 0.0
    %599 = vmatpush.msra.mxu0 0.0
    %600 = vmatpush.msra.mxu0 0.0
    %v601 = vand.u32 %v35, 4294901760
    %v602 = vsub.f32 %v35, %v601
    %603 = vmatpush.msra.mxu0 %v602
    %v604 = vand.u32 %v34, 4294901760
    %v605 = vsub.f32 %v34, %v604
    %606 = vmatpush.msra.mxu0 %v605
    %v607 = vand.u32 %v33, 4294901760
    %v608 = vsub.f32 %v33, %v607
    %609 = vmatpush.msra.mxu0 %v608
    %v610 = vand.u32 %v32, 4294901760
    %v611 = vsub.f32 %v32, %v610
    %612 = vmatpush.msra.mxu0 %v611
    %v613 = vand.u32 %v517, 4294901760
    %v614 = vsub.f32 %v517, %v613
    %615 = vmatmul.f32.gmra.mxu0 %v614
    %v616 = vpop.f32.mrf.mxu0
    %v617 = vadd.f32 %v587, %v616
    %618 = vdwg.mxu0
    %619 = vmatpush.msra.mxu0 0.0
    %620 = vmatpush.msra.mxu0 0.0
    %621 = vmatpush.msra.mxu0 0.0
    %622 = vmatpush.msra.mxu0 0.0
    %623 = vmatpush.msra.mxu0 0.0
    %624 = vmatpush.msra.mxu0 0.0
    %625 = vmatpush.msra.mxu0 0.0
    %626 = vmatpush.msra.mxu0 0.0
    %627 = vmatpush.msra.mxu0 0.0
    %628 = vmatpush.msra.mxu0 0.0
    %629 = vmatpush.msra.mxu0 0.0
    %630 = vmatpush.msra.mxu0 0.0
    %v631 = vand.u32 %v35, 4294901760
    %632 = vmatpush.msra.mxu0 %v631
    %v633 = vand.u32 %v34, 4294901760
    %634 = vmatpush.msra.mxu0 %v633
    %v635 = vand.u32 %v33, 4294901760
    %636 = vmatpush.msra.mxu0 %v635
    %v637 = vand.u32 %v32, 4294901760
    %638 = vmatpush.msra.mxu0 %v637
    %v639 = vand.u32 %v517, 4294901760
    %v640 = vsub.f32 %v517, %v639
    %v641 = vand.u32 %v640, 4294901760
    %642 = vmatmul.f32.gmra.mxu0 %v641
    %v643 = vpop.f32.mrf.mxu0
    %v644 = vadd.f32 %v617, %v643
    %645 = vdwg.mxu0
    %646 = vmatpush.msra.mxu0 0.0
    %647 = vmatpush.msra.mxu0 0.0
    %648 = vmatpush.msra.mxu0 0.0
    %649 = vmatpush.msra.mxu0 0.0
    %650 = vmatpush.msra.mxu0 0.0
    %651 = vmatpush.msra.mxu0 0.0
    %652 = vmatpush.msra.mxu0 0.0
    %653 = vmatpush.msra.mxu0 0.0
    %654 = vmatpush.msra.mxu0 0.0
    %655 = vmatpush.msra.mxu0 0.0
    %656 = vmatpush.msra.mxu0 0.0
    %657 = vmatpush.msra.mxu0 0.0
    %v658 = vand.u32 %v35, 4294901760
    %v659 = vsub.f32 %v35, %v658
    %v660 = vand.u32 %v659, 4294901760
    %661 = vmatpush.msra.mxu0 %v660
    %v662 = vand.u32 %v34, 4294901760
    %v663 = vsub.f32 %v34, %v662
    %v664 = vand.u32 %v663, 4294901760
    %665 = vmatpush.msra.mxu0 %v664
    %v666 = vand.u32 %v33, 4294901760
    %v667 = vsub.f32 %v33, %v666
    %v668 = vand.u32 %v667, 4294901760
    %669 = vmatpush.msra.mxu0 %v668
    %v670 = vand.u32 %v32, 4294901760
    %v671 = vsub.f32 %v32, %v670
    %v672 = vand.u32 %v671, 4294901760
    %673 = vmatpush.msra.mxu0 %v672
    %v674 = vand.u32 %v517, 4294901760
    %675 = vmatmul.f32.gmra.mxu0 %v674
    %v676 = vpop.f32.mrf.mxu0
    %v677 = vadd.f32 %v644, %v676
    %678 = vdwg.mxu0
    %679 = vmatpush.msra.mxu0 0.0
    %680 = vmatpush.msra.mxu0 0.0
    %681 = vmatpush.msra.mxu0 0.0
    %682 = vmatpush.msra.mxu0 0.0
    %683 = vmatpush.msra.mxu0 0.0
    %684 = vmatpush.msra.mxu0 0.0
    %685 = vmatpush.msra.mxu0 0.0
    %686 = vmatpush.msra.mxu0 0.0
    %687 = vmatpush.msra.mxu0 0.0
    %688 = vmatpush.msra.mxu0 0.0
    %689 = vmatpush.msra.mxu0 0.0
    %690 = vmatpush.msra.mxu0 0.0
    %v691 = vand.u32 %v35, 4294901760
    %692 = vmatpush.msra.mxu0 %v691
    %v693 = vand.u32 %v34, 4294901760
    %694 = vmatpush.msra.mxu0 %v693
    %v695 = vand.u32 %v33, 4294901760
    %696 = vmatpush.msra.mxu0 %v695
    %v697 = vand.u32 %v32, 4294901760
    %698 = vmatpush.msra.mxu0 %v697
    %v699 = vand.u32 %v517, 4294901760
    %700 = vmatmul.f32.gmra.mxu0 %v699
    %v701 = vpop.f32.mrf.mxu0
    %v702 = vadd.f32 %v677, %v701
    %703 = vdwg.mxu0
    %v705 = vrot.slane %v702, 6
    %v707 = vadd.f32 %v274, %v705
    %v708 = vxor.u32 %v707, 2147483648
    %v709 = vmul.f32 %v708, 1.442695
    %v710 = vpow.pop %v709
    %v711 = vadd.f32 %v710, 1.0
    %v712 = vrcp.pop %v711
    %v713 = vmul.f32 %v711, %v712
    %v714 = vsub.f32 1.0, %v713
    %v715 = vmul.f32 %v712, %v714
    %v716 = vadd.f32 %v712, %v715
    %vm717 = vweird.f32 %v711
    %vm718 = vweird.f32 %v712
    %vm719 = vmor %vm717, %vm718
    %v720 = vsel %vm719, %v712, %v716
    %v721 = vand.u32 2147483647, %v711
    %vm722 = vcmp.eq.f32.partialorder %v721, 8.507059e+37
    %v723 = vand.u32 %v711, 2147483648
    %v724 = vor.u32 1.1754944e-38, %v723
    %v725 = vsel %vm722, %v724, %v720
    %v726 = vmul.f32 1.0, %v725
    %v727 = vmul.f32 %v726, 2.0
    %v728 = vsub.f32 %v727, 1.0
    %v730 = vrot.slane %v500, 6
    %v732 = vmul.f32 %v726, %v730
    %734 = vrot.lane.b32.xlu0 %v728, 64
    %v735 = vpop.permute.xlu0 %734
    %v737 = vmul.f32 %v726, %v735
    %739 = vrot.lane.b32.xlu0 %v737, 32
    %v740 = vpop.permute.xlu0 %739
    %v742 = vadd.f32 %v732, %v740
    %v743 = vtanh.pop %v742
    %745 = vrot.lane.b32.xlu0 %v743, 64
    %v746 = vpop.permute.xlu0 %745
    %v748 = vmul.f32 %v726, %v746
    %v750 = vrot.slane %v513, 6
    %v752 = vsel %vm512, %v748, %v750
    %v754 = vrot.slane %v748, 2
    %755 = vrot.lane.b32.xlu0 %v754, 32
    %v756 = vpop.permute.xlu0 %755
    %v757 = vsel %vm57, %v756, 0
    %759 = vmatpush.msra.mxu0 0.0
    %760 = vmatpush.msra.mxu0 0.0
    %761 = vmatpush.msra.mxu0 0.0
    %762 = vmatpush.msra.mxu0 0.0
    %763 = vmatpush.msra.mxu0 0.0
    %764 = vmatpush.msra.mxu0 0.0
    %765 = vmatpush.msra.mxu0 0.0
    %766 = vmatpush.msra.mxu0 0.0
    %767 = vmatpush.msra.mxu0 0.0
    %768 = vmatpush.msra.mxu0 0.0
    %769 = vmatpush.msra.mxu0 0.0
    %770 = vmatpush.msra.mxu0 0.0
    %v771 = vand.u32 %v35, 4294901760
    %772 = vmatpush.msra.mxu0 %v771
    %v773 = vand.u32 %v34, 4294901760
    %774 = vmatpush.msra.mxu0 %v773
    %v775 = vand.u32 %v33, 4294901760
    %776 = vmatpush.msra.mxu0 %v775
    %v777 = vand.u32 %v32, 4294901760
    %778 = vmatpush.msra.mxu0 %v777
    %v779 = vand.u32 %v757, 4294901760
    %v780 = vsub.f32 %v757, %v779
    %v781 = vand.u32 %v780, 4294901760
    %v782 = vsub.f32 %v780, %v781
    %v783 = vand.u32 %v782, 4294901760
    %784 = vmatmul.f32.gmra.mxu0 %v783
    %v785 = vpop.f32.mrf.mxu0
    %v786 = vadd.f32 0.0, %v785
    %787 = vdwg.mxu0
    %788 = vmatpush.msra.mxu0 0.0
    %789 = vmatpush.msra.mxu0 0.0
    %790 = vmatpush.msra.mxu0 0.0
    %791 = vmatpush.msra.mxu0 0.0
    %792 = vmatpush.msra.mxu0 0.0
    %793 = vmatpush.msra.mxu0 0.0
    %794 = vmatpush.msra.mxu0 0.0
    %795 = vmatpush.msra.mxu0 0.0
    %796 = vmatpush.msra.mxu0 0.0
    %797 = vmatpush.msra.mxu0 0.0
    %798 = vmatpush.msra.mxu0 0.0
    %799 = vmatpush.msra.mxu0 0.0
    %v800 = vand.u32 %v35, 4294901760
    %v801 = vsub.f32 %v35, %v800
    %v802 = vand.u32 %v801, 4294901760
    %v803 = vsub.f32 %v801, %v802
    %v804 = vand.u32 %v803, 4294901760
    %805 = vmatpush.msra.mxu0 %v804
    %v806 = vand.u32 %v34, 4294901760
    %v807 = vsub.f32 %v34, %v806
    %v808 = vand.u32 %v807, 4294901760
    %v809 = vsub.f32 %v807, %v808
    %v810 = vand.u32 %v809, 4294901760
    %811 = vmatpush.msra.mxu0 %v810
    %v812 = vand.u32 %v33, 4294901760
    %v813 = vsub.f32 %v33, %v812
    %v814 = vand.u32 %v813, 4294901760
    %v815 = vsub.f32 %v813, %v814
    %v816 = vand.u32 %v815, 4294901760
    %817 = vmatpush.msra.mxu0 %v816
    %v818 = vand.u32 %v32, 4294901760
    %v819 = vsub.f32 %v32, %v818
    %v820 = vand.u32 %v819, 4294901760
    %v821 = vsub.f32 %v819, %v820
    %v822 = vand.u32 %v821, 4294901760
    %823 = vmatpush.msra.mxu0 %v822
    %v824 = vand.u32 %v757, 4294901760
    %825 = vmatmul.f32.gmra.mxu0 %v824
    %v826 = vpop.f32.mrf.mxu0
    %v827 = vadd.f32 %v786, %v826
    %828 = vdwg.mxu0
    %829 = vmatpush.msra.mxu0 0.0
    %830 = vmatpush.msra.mxu0 0.0
    %831 = vmatpush.msra.mxu0 0.0
    %832 = vmatpush.msra.mxu0 0.0
    %833 = vmatpush.msra.mxu0 0.0
    %834 = vmatpush.msra.mxu0 0.0
    %835 = vmatpush.msra.mxu0 0.0
    %836 = vmatpush.msra.mxu0 0.0
    %837 = vmatpush.msra.mxu0 0.0
    %838 = vmatpush.msra.mxu0 0.0
    %839 = vmatpush.msra.mxu0 0.0
    %840 = vmatpush.msra.mxu0 0.0
    %v841 = vand.u32 %v35, 4294901760
    %v842 = vsub.f32 %v35, %v841
    %843 = vmatpush.msra.mxu0 %v842
    %v844 = vand.u32 %v34, 4294901760
    %v845 = vsub.f32 %v34, %v844
    %846 = vmatpush.msra.mxu0 %v845
    %v847 = vand.u32 %v33, 4294901760
    %v848 = vsub.f32 %v33, %v847
    %849 = vmatpush.msra.mxu0 %v848
    %v850 = vand.u32 %v32, 4294901760
    %v851 = vsub.f32 %v32, %v850
    %852 = vmatpush.msra.mxu0 %v851
    %v853 = vand.u32 %v757, 4294901760
    %v854 = vsub.f32 %v757, %v853
    %855 = vmatmul.f32.gmra.mxu0 %v854
    %v856 = vpop.f32.mrf.mxu0
    %v857 = vadd.f32 %v827, %v856
    %858 = vdwg.mxu0
    %859 = vmatpush.msra.mxu0 0.0
    %860 = vmatpush.msra.mxu0 0.0
    %861 = vmatpush.msra.mxu0 0.0
    %862 = vmatpush.msra.mxu0 0.0
    %863 = vmatpush.msra.mxu0 0.0
    %864 = vmatpush.msra.mxu0 0.0
    %865 = vmatpush.msra.mxu0 0.0
    %866 = vmatpush.msra.mxu0 0.0
    %867 = vmatpush.msra.mxu0 0.0
    %868 = vmatpush.msra.mxu0 0.0
    %869 = vmatpush.msra.mxu0 0.0
    %870 = vmatpush.msra.mxu0 0.0
    %v871 = vand.u32 %v35, 4294901760
    %872 = vmatpush.msra.mxu0 %v871
    %v873 = vand.u32 %v34, 4294901760
    %874 = vmatpush.msra.mxu0 %v873
    %v875 = vand.u32 %v33, 4294901760
    %876 = vmatpush.msra.mxu0 %v875
    %v877 = vand.u32 %v32, 4294901760
    %878 = vmatpush.msra.mxu0 %v877
    %v879 = vand.u32 %v757, 4294901760
    %v880 = vsub.f32 %v757, %v879
    %v881 = vand.u32 %v880, 4294901760
    %882 = vmatmul.f32.gmra.mxu0 %v881
    %v883 = vpop.f32.mrf.mxu0
    %v884 = vadd.f32 %v857, %v883
    %885 = vdwg.mxu0
    %886 = vmatpush.msra.mxu0 0.0
    %887 = vmatpush.msra.mxu0 0.0
    %888 = vmatpush.msra.mxu0 0.0
    %889 = vmatpush.msra.mxu0 0.0
    %890 = vmatpush.msra.mxu0 0.0
    %891 = vmatpush.msra.mxu0 0.0
    %892 = vmatpush.msra.mxu0 0.0
    %893 = vmatpush.msra.mxu0 0.0
    %894 = vmatpush.msra.mxu0 0.0
    %895 = vmatpush.msra.mxu0 0.0
    %896 = vmatpush.msra.mxu0 0.0
    %897 = vmatpush.msra.mxu0 0.0
    %v898 = vand.u32 %v35, 4294901760
    %v899 = vsub.f32 %v35, %v898
    %v900 = vand.u32 %v899, 4294901760
    %901 = vmatpush.msra.mxu0 %v900
    %v902 = vand.u32 %v34, 4294901760
    %v903 = vsub.f32 %v34, %v902
    %v904 = vand.u32 %v903, 4294901760
    %905 = vmatpush.msra.mxu0 %v904
    %v906 = vand.u32 %v33, 4294901760
    %v907 = vsub.f32 %v33, %v906
    %v908 = vand.u32 %v907, 4294901760
    %909 = vmatpush.msra.mxu0 %v908
    %v910 = vand.u32 %v32, 4294901760
    %v911 = vsub.f32 %v32, %v910
    %v912 = vand.u32 %v911, 4294901760
    %913 = vmatpush.msra.mxu0 %v912
    %v914 = vand.u32 %v757, 4294901760
    %915 = vmatmul.f32.gmra.mxu0 %v914
    %v916 = vpop.f32.mrf.mxu0
    %v917 = vadd.f32 %v884, %v916
    %918 = vdwg.mxu0
    %919 = vmatpush.msra.mxu0 0.0
    %920 = vmatpush.msra.mxu0 0.0
    %921 = vmatpush.msra.mxu0 0.0
    %922 = vmatpush.msra.mxu0 0.0
    %923 = vmatpush.msra.mxu0 0.0
    %924 = vmatpush.msra.mxu0 0.0
    %925 = vmatpush.msra.mxu0 0.0
    %926 = vmatpush.msra.mxu0 0.0
    %927 = vmatpush.msra.mxu0 0.0
    %928 = vmatpush.msra.mxu0 0.0
    %929 = vmatpush.msra.mxu0 0.0
    %930 = vmatpush.msra.mxu0 0.0
    %v931 = vand.u32 %v35, 4294901760
    %932 = vmatpush.msra.mxu0 %v931
    %v933 = vand.u32 %v34, 4294901760
    %934 = vmatpush.msra.mxu0 %v933
    %v935 = vand.u32 %v33, 4294901760
    %936 = vmatpush.msra.mxu0 %v935
    %v937 = vand.u32 %v32, 4294901760
    %938 = vmatpush.msra.mxu0 %v937
    %v939 = vand.u32 %v757, 4294901760
    %940 = vmatmul.f32.gmra.mxu0 %v939
    %v941 = vpop.f32.mrf.mxu0
    %v942 = vadd.f32 %v917, %v941
    %943 = vdwg.mxu0
    %v945 = vrot.slane %v942, 4
    %v947 = vadd.f32 %v274, %v945
    %v948 = vxor.u32 %v947, 2147483648
    %v949 = vmul.f32 %v948, 1.442695
    %v950 = vpow.pop %v949
    %v951 = vadd.f32 %v950, 1.0
    %v952 = vrcp.pop %v951
    %v953 = vmul.f32 %v951, %v952
    %v954 = vsub.f32 1.0, %v953
    %v955 = vmul.f32 %v952, %v954
    %v956 = vadd.f32 %v952, %v955
    %vm957 = vweird.f32 %v951
    %vm958 = vweird.f32 %v952
    %vm959 = vmor %vm957, %vm958
    %v960 = vsel %vm959, %v952, %v956
    %v961 = vand.u32 2147483647, %v951
    %vm962 = vcmp.eq.f32.partialorder %v961, 8.507059e+37
    %v963 = vand.u32 %v951, 2147483648
    %v964 = vor.u32 1.1754944e-38, %v963
    %v965 = vsel %vm962, %v964, %v960
    %v966 = vmul.f32 1.0, %v965
    %v967 = vmul.f32 %v966, 2.0
    %v968 = vsub.f32 %v967, 1.0
    %v970 = vrot.slane %v742, 6
    %v972 = vmul.f32 %v966, %v970
    %974 = vrot.lane.b32.xlu0 %v968, 64
    %v975 = vpop.permute.xlu0 %974
    %v977 = vmul.f32 %v966, %v975
    %979 = vrot.lane.b32.xlu0 %v977, 32
    %v980 = vpop.permute.xlu0 %979
    %v982 = vadd.f32 %v972, %v980
    %v983 = vtanh.pop %v982
    %985 = vrot.lane.b32.xlu0 %v983, 64
    %v986 = vpop.permute.xlu0 %985
    %v988 = vmul.f32 %v966, %v986
    %v990 = vrot.slane %v752, 6
    %v992 = vsel %vm512, %v988, %v990
    %v994 = vrot.slane %v988, 4
    %995 = vrot.lane.b32.xlu0 %v994, 32
    %v996 = vpop.permute.xlu0 %995
    %v997 = vsel %vm57, %v996, 0
    %999 = vmatpush.msra.mxu0 0.0
    %1000 = vmatpush.msra.mxu0 0.0
    %1001 = vmatpush.msra.mxu0 0.0
    %1002 = vmatpush.msra.mxu0 0.0
    %1003 = vmatpush.msra.mxu0 0.0
    %1004 = vmatpush.msra.mxu0 0.0
    %1005 = vmatpush.msra.mxu0 0.0
    %1006 = vmatpush.msra.mxu0 0.0
    %1007 = vmatpush.msra.mxu0 0.0
    %1008 = vmatpush.msra.mxu0 0.0
    %1009 = vmatpush.msra.mxu0 0.0
    %1010 = vmatpush.msra.mxu0 0.0
    %v1011 = vand.u32 %v35, 4294901760
    %1012 = vmatpush.msra.mxu0 %v1011
    %v1013 = vand.u32 %v34, 4294901760
    %1014 = vmatpush.msra.mxu0 %v1013
    %v1015 = vand.u32 %v33, 4294901760
    %1016 = vmatpush.msra.mxu0 %v1015
    %v1017 = vand.u32 %v32, 4294901760
    %1018 = vmatpush.msra.mxu0 %v1017
    %v1019 = vand.u32 %v997, 4294901760
    %v1020 = vsub.f32 %v997, %v1019
    %v1021 = vand.u32 %v1020, 4294901760
    %v1022 = vsub.f32 %v1020, %v1021
    %v1023 = vand.u32 %v1022, 4294901760
    %1024 = vmatmul.f32.gmra.mxu0 %v1023
    %v1025 = vpop.f32.mrf.mxu0
    %v1026 = vadd.f32 0.0, %v1025
    %1027 = vdwg.mxu0
    %1028 = vmatpush.msra.mxu0 0.0
    %1029 = vmatpush.msra.mxu0 0.0
    %1030 = vmatpush.msra.mxu0 0.0
    %1031 = vmatpush.msra.mxu0 0.0
    %1032 = vmatpush.msra.mxu0 0.0
    %1033 = vmatpush.msra.mxu0 0.0
    %1034 = vmatpush.msra.mxu0 0.0
    %1035 = vmatpush.msra.mxu0 0.0
    %1036 = vmatpush.msra.mxu0 0.0
    %1037 = vmatpush.msra.mxu0 0.0
    %1038 = vmatpush.msra.mxu0 0.0
    %1039 = vmatpush.msra.mxu0 0.0
    %v1040 = vand.u32 %v35, 4294901760
    %v1041 = vsub.f32 %v35, %v1040
    %v1042 = vand.u32 %v1041, 4294901760
    %v1043 = vsub.f32 %v1041, %v1042
    %v1044 = vand.u32 %v1043, 4294901760
    %1045 = vmatpush.msra.mxu0 %v1044
    %v1046 = vand.u32 %v34, 4294901760
    %v1047 = vsub.f32 %v34, %v1046
    %v1048 = vand.u32 %v1047, 4294901760
    %v1049 = vsub.f32 %v1047, %v1048
    %v1050 = vand.u32 %v1049, 4294901760
    %1051 = vmatpush.msra.mxu0 %v1050
    %v1052 = vand.u32 %v33, 4294901760
    %v1053 = vsub.f32 %v33, %v1052
    %v1054 = vand.u32 %v1053, 4294901760
    %v1055 = vsub.f32 %v1053, %v1054
    %v1056 = vand.u32 %v1055, 4294901760
    %1057 = vmatpush.msra.mxu0 %v1056
    %v1058 = vand.u32 %v32, 4294901760
    %v1059 = vsub.f32 %v32, %v1058
    %v1060 = vand.u32 %v1059, 4294901760
    %v1061 = vsub.f32 %v1059, %v1060
    %v1062 = vand.u32 %v1061, 4294901760
    %1063 = vmatpush.msra.mxu0 %v1062
    %v1064 = vand.u32 %v997, 4294901760
    %1065 = vmatmul.f32.gmra.mxu0 %v1064
    %v1066 = vpop.f32.mrf.mxu0
    %v1067 = vadd.f32 %v1026, %v1066
    %1068 = vdwg.mxu0
    %1069 = vmatpush.msra.mxu0 0.0
    %1070 = vmatpush.msra.mxu0 0.0
    %1071 = vmatpush.msra.mxu0 0.0
    %1072 = vmatpush.msra.mxu0 0.0
    %1073 = vmatpush.msra.mxu0 0.0
    %1074 = vmatpush.msra.mxu0 0.0
    %1075 = vmatpush.msra.mxu0 0.0
    %1076 = vmatpush.msra.mxu0 0.0
    %1077 = vmatpush.msra.mxu0 0.0
    %1078 = vmatpush.msra.mxu0 0.0
    %1079 = vmatpush.msra.mxu0 0.0
    %1080 = vmatpush.msra.mxu0 0.0
    %v1081 = vand.u32 %v35, 4294901760
    %v1082 = vsub.f32 %v35, %v1081
    %1083 = vmatpush.msra.mxu0 %v1082
    %v1084 = vand.u32 %v34, 4294901760
    %v1085 = vsub.f32 %v34, %v1084
    %1086 = vmatpush.msra.mxu0 %v1085
    %v1087 = vand.u32 %v33, 4294901760
    %v1088 = vsub.f32 %v33, %v1087
    %1089 = vmatpush.msra.mxu0 %v1088
    %v1090 = vand.u32 %v32, 4294901760
    %v1091 = vsub.f32 %v32, %v1090
    %1092 = vmatpush.msra.mxu0 %v1091
    %v1093 = vand.u32 %v997, 4294901760
    %v1094 = vsub.f32 %v997, %v1093
    %1095 = vmatmul.f32.gmra.mxu0 %v1094
    %v1096 = vpop.f32.mrf.mxu0
    %v1097 = vadd.f32 %v1067, %v1096
    %1098 = vdwg.mxu0
    %1099 = vmatpush.msra.mxu0 0.0
    %1100 = vmatpush.msra.mxu0 0.0
    %1101 = vmatpush.msra.mxu0 0.0
    %1102 = vmatpush.msra.mxu0 0.0
    %1103 = vmatpush.msra.mxu0 0.0
    %1104 = vmatpush.msra.mxu0 0.0
    %1105 = vmatpush.msra.mxu0 0.0
    %1106 = vmatpush.msra.mxu0 0.0
    %1107 = vmatpush.msra.mxu0 0.0
    %1108 = vmatpush.msra.mxu0 0.0
    %1109 = vmatpush.msra.mxu0 0.0
    %1110 = vmatpush.msra.mxu0 0.0
    %v1111 = vand.u32 %v35, 4294901760
    %1112 = vmatpush.msra.mxu0 %v1111
    %v1113 = vand.u32 %v34, 4294901760
    %1114 = vmatpush.msra.mxu0 %v1113
    %v1115 = vand.u32 %v33, 4294901760
    %1116 = vmatpush.msra.mxu0 %v1115
    %v1117 = vand.u32 %v32, 4294901760
    %1118 = vmatpush.msra.mxu0 %v1117
    %v1119 = vand.u32 %v997, 4294901760
    %v1120 = vsub.f32 %v997, %v1119
    %v1121 = vand.u32 %v1120, 4294901760
    %1122 = vmatmul.f32.gmra.mxu0 %v1121
    %v1123 = vpop.f32.mrf.mxu0
    %v1124 = vadd.f32 %v1097, %v1123
    %1125 = vdwg.mxu0
    %1126 = vmatpush.msra.mxu0 0.0
    %1127 = vmatpush.msra.mxu0 0.0
    %1128 = vmatpush.msra.mxu0 0.0
    %1129 = vmatpush.msra.mxu0 0.0
    %1130 = vmatpush.msra.mxu0 0.0
    %1131 = vmatpush.msra.mxu0 0.0
    %1132 = vmatpush.msra.mxu0 0.0
    %1133 = vmatpush.msra.mxu0 0.0
    %1134 = vmatpush.msra.mxu0 0.0
    %1135 = vmatpush.msra.mxu0 0.0
    %1136 = vmatpush.msra.mxu0 0.0
    %1137 = vmatpush.msra.mxu0 0.0
    %v1138 = vand.u32 %v35, 4294901760
    %v1139 = vsub.f32 %v35, %v1138
    %v1140 = vand.u32 %v1139, 4294901760
    %1141 = vmatpush.msra.mxu0 %v1140
    %v1142 = vand.u32 %v34, 4294901760
    %v1143 = vsub.f32 %v34, %v1142
    %v1144 = vand.u32 %v1143, 4294901760
    %1145 = vmatpush.msra.mxu0 %v1144
    %v1146 = vand.u32 %v33, 4294901760
    %v1147 = vsub.f32 %v33, %v1146
    %v1148 = vand.u32 %v1147, 4294901760
    %1149 = vmatpush.msra.mxu0 %v1148
    %v1150 = vand.u32 %v32, 4294901760
    %v1151 = vsub.f32 %v32, %v1150
    %v1152 = vand.u32 %v1151, 4294901760
    %1153 = vmatpush.msra.mxu0 %v1152
    %v1154 = vand.u32 %v997, 4294901760
    %1155 = vmatmul.f32.gmra.mxu0 %v1154
    %v1156 = vpop.f32.mrf.mxu0
    %v1157 = vadd.f32 %v1124, %v1156
    %1158 = vdwg.mxu0
    %1159 = vmatpush.msra.mxu0 0.0
    %1160 = vmatpush.msra.mxu0 0.0
    %1161 = vmatpush.msra.mxu0 0.0
    %1162 = vmatpush.msra.mxu0 0.0
    %1163 = vmatpush.msra.mxu0 0.0
    %1164 = vmatpush.msra.mxu0 0.0
    %1165 = vmatpush.msra.mxu0 0.0
    %1166 = vmatpush.msra.mxu0 0.0
    %1167 = vmatpush.msra.mxu0 0.0
    %1168 = vmatpush.msra.mxu0 0.0
    %1169 = vmatpush.msra.mxu0 0.0
    %1170 = vmatpush.msra.mxu0 0.0
    %v1171 = vand.u32 %v35, 4294901760
    %1172 = vmatpush.msra.mxu0 %v1171
    %v1173 = vand.u32 %v34, 4294901760
    %1174 = vmatpush.msra.mxu0 %v1173
    %v1175 = vand.u32 %v33, 4294901760
    %1176 = vmatpush.msra.mxu0 %v1175
    %v1177 = vand.u32 %v32, 4294901760
    %1178 = vmatpush.msra.mxu0 %v1177
    %v1179 = vand.u32 %v997, 4294901760
    %1180 = vmatmul.f32.gmra.mxu0 %v1179
    %v1181 = vpop.f32.mrf.mxu0
    %v1182 = vadd.f32 %v1157, %v1181
    %1183 = vdwg.mxu0
    %v1185 = vrot.slane %v1182, 2
    %v1187 = vadd.f32 %v274, %v1185
    %v1188 = vxor.u32 %v1187, 2147483648
    %v1189 = vmul.f32 %v1188, 1.442695
    %v1190 = vpow.pop %v1189
    %v1191 = vadd.f32 %v1190, 1.0
    %v1192 = vrcp.pop %v1191
    %v1193 = vmul.f32 %v1191, %v1192
    %v1194 = vsub.f32 1.0, %v1193
    %v1195 = vmul.f32 %v1192, %v1194
    %v1196 = vadd.f32 %v1192, %v1195
    %vm1197 = vweird.f32 %v1191
    %vm1198 = vweird.f32 %v1192
    %vm1199 = vmor %vm1197, %vm1198
    %v1200 = vsel %vm1199, %v1192, %v1196
    %v1201 = vand.u32 2147483647, %v1191
    %vm1202 = vcmp.eq.f32.partialorder %v1201, 8.507059e+37
    %v1203 = vand.u32 %v1191, 2147483648
    %v1204 = vor.u32 1.1754944e-38, %v1203
    %v1205 = vsel %vm1202, %v1204, %v1200
    %v1206 = vmul.f32 1.0, %v1205
    %v1207 = vmul.f32 %v1206, 2.0
    %v1208 = vsub.f32 %v1207, 1.0
    %v1210 = vrot.slane %v982, 6
    %v1212 = vmul.f32 %v1206, %v1210
    %1214 = vrot.lane.b32.xlu0 %v1208, 64
    %v1215 = vpop.permute.xlu0 %1214
    %v1217 = vmul.f32 %v1206, %v1215
    %1219 = vrot.lane.b32.xlu0 %v1217, 32
    %v1220 = vpop.permute.xlu0 %1219
    %v1222 = vadd.f32 %v1212, %v1220
    %v1223 = vtanh.pop %v1222
    %1225 = vrot.lane.b32.xlu0 %v1223, 64
    %v1226 = vpop.permute.xlu0 %1225
    %v1228 = vmul.f32 %v1206, %v1226
    %v1230 = vrot.slane %v992, 6
    %v1232 = vsel %vm512, %v1228, %v1230
    %v1234 = vrot.slane %v1228, 6
    %1235 = vrot.lane.b32.xlu0 %v1234, 32
    %v1236 = vpop.permute.xlu0 %1235
    %v1237 = vsel %vm57, %v1236, 0
    %1239 = vmatpush.msra.mxu0 0.0
    %1240 = vmatpush.msra.mxu0 0.0
    %1241 = vmatpush.msra.mxu0 0.0
    %1242 = vmatpush.msra.mxu0 0.0
    %1243 = vmatpush.msra.mxu0 0.0
    %1244 = vmatpush.msra.mxu0 0.0
    %1245 = vmatpush.msra.mxu0 0.0
    %1246 = vmatpush.msra.mxu0 0.0
    %1247 = vmatpush.msra.mxu0 0.0
    %1248 = vmatpush.msra.mxu0 0.0
    %1249 = vmatpush.msra.mxu0 0.0
    %1250 = vmatpush.msra.mxu0 0.0
    %v1251 = vand.u32 %v35, 4294901760
    %1252 = vmatpush.msra.mxu0 %v1251
    %v1253 = vand.u32 %v34, 4294901760
    %1254 = vmatpush.msra.mxu0 %v1253
    %v1255 = vand.u32 %v33, 4294901760
    %1256 = vmatpush.msra.mxu0 %v1255
    %v1257 = vand.u32 %v32, 4294901760
    %1258 = vmatpush.msra.mxu0 %v1257
    %v1259 = vand.u32 %v1237, 4294901760
    %v1260 = vsub.f32 %v1237, %v1259
    %v1261 = vand.u32 %v1260, 4294901760
    %v1262 = vsub.f32 %v1260, %v1261
    %v1263 = vand.u32 %v1262, 4294901760
    %1264 = vmatmul.f32.gmra.mxu0 %v1263
    %v1265 = vpop.f32.mrf.mxu0
    %v1266 = vadd.f32 0.0, %v1265
    %1267 = vdwg.mxu0
    %1268 = vmatpush.msra.mxu0 0.0
    %1269 = vmatpush.msra.mxu0 0.0
    %1270 = vmatpush.msra.mxu0 0.0
    %1271 = vmatpush.msra.mxu0 0.0
    %1272 = vmatpush.msra.mxu0 0.0
    %1273 = vmatpush.msra.mxu0 0.0
    %1274 = vmatpush.msra.mxu0 0.0
    %1275 = vmatpush.msra.mxu0 0.0
    %1276 = vmatpush.msra.mxu0 0.0
    %1277 = vmatpush.msra.mxu0 0.0
    %1278 = vmatpush.msra.mxu0 0.0
    %1279 = vmatpush.msra.mxu0 0.0
    %v1280 = vand.u32 %v35, 4294901760
    %v1281 = vsub.f32 %v35, %v1280
    %v1282 = vand.u32 %v1281, 4294901760
    %v1283 = vsub.f32 %v1281, %v1282
    %v1284 = vand.u32 %v1283, 4294901760
    %1285 = vmatpush.msra.mxu0 %v1284
    %v1286 = vand.u32 %v34, 4294901760
    %v1287 = vsub.f32 %v34, %v1286
    %v1288 = vand.u32 %v1287, 4294901760
    %v1289 = vsub.f32 %v1287, %v1288
    %v1290 = vand.u32 %v1289, 4294901760
    %1291 = vmatpush.msra.mxu0 %v1290
    %v1292 = vand.u32 %v33, 4294901760
    %v1293 = vsub.f32 %v33, %v1292
    %v1294 = vand.u32 %v1293, 4294901760
    %v1295 = vsub.f32 %v1293, %v1294
    %v1296 = vand.u32 %v1295, 4294901760
    %1297 = vmatpush.msra.mxu0 %v1296
    %v1298 = vand.u32 %v32, 4294901760
    %v1299 = vsub.f32 %v32, %v1298
    %v1300 = vand.u32 %v1299, 4294901760
    %v1301 = vsub.f32 %v1299, %v1300
    %v1302 = vand.u32 %v1301, 4294901760
    %1303 = vmatpush.msra.mxu0 %v1302
    %v1304 = vand.u32 %v1237, 4294901760
    %1305 = vmatmul.f32.gmra.mxu0 %v1304
    %v1306 = vpop.f32.mrf.mxu0
    %v1307 = vadd.f32 %v1266, %v1306
    %1308 = vdwg.mxu0
    %1309 = vmatpush.msra.mxu0 0.0
    %1310 = vmatpush.msra.mxu0 0.0
    %1311 = vmatpush.msra.mxu0 0.0
    %1312 = vmatpush.msra.mxu0 0.0
    %1313 = vmatpush.msra.mxu0 0.0
    %1314 = vmatpush.msra.mxu0 0.0
    %1315 = vmatpush.msra.mxu0 0.0
    %1316 = vmatpush.msra.mxu0 0.0
    %1317 = vmatpush.msra.mxu0 0.0
    %1318 = vmatpush.msra.mxu0 0.0
    %1319 = vmatpush.msra.mxu0 0.0
    %1320 = vmatpush.msra.mxu0 0.0
    %v1321 = vand.u32 %v35, 4294901760
    %v1322 = vsub.f32 %v35, %v1321
    %1323 = vmatpush.msra.mxu0 %v1322
    %v1324 = vand.u32 %v34, 4294901760
    %v1325 = vsub.f32 %v34, %v1324
    %1326 = vmatpush.msra.mxu0 %v1325
    %v1327 = vand.u32 %v33, 4294901760
    %v1328 = vsub.f32 %v33, %v1327
    %1329 = vmatpush.msra.mxu0 %v1328
    %v1330 = vand.u32 %v32, 4294901760
    %v1331 = vsub.f32 %v32, %v1330
    %1332 = vmatpush.msra.mxu0 %v1331
    %v1333 = vand.u32 %v1237, 4294901760
    %v1334 = vsub.f32 %v1237, %v1333
    %1335 = vmatmul.f32.gmra.mxu0 %v1334
    %v1336 = vpop.f32.mrf.mxu0
    %v1337 = vadd.f32 %v1307, %v1336
    %1338 = vdwg.mxu0
    %1339 = vmatpush.msra.mxu0 0.0
    %1340 = vmatpush.msra.mxu0 0.0
    %1341 = vmatpush.msra.mxu0 0.0
    %1342 = vmatpush.msra.mxu0 0.0
    %1343 = vmatpush.msra.mxu0 0.0
    %1344 = vmatpush.msra.mxu0 0.0
    %1345 = vmatpush.msra.mxu0 0.0
    %1346 = vmatpush.msra.mxu0 0.0
    %1347 = vmatpush.msra.mxu0 0.0
    %1348 = vmatpush.msra.mxu0 0.0
    %1349 = vmatpush.msra.mxu0 0.0
    %1350 = vmatpush.msra.mxu0 0.0
    %v1351 = vand.u32 %v35, 4294901760
    %1352 = vmatpush.msra.mxu0 %v1351
    %v1353 = vand.u32 %v34, 4294901760
    %1354 = vmatpush.msra.mxu0 %v1353
    %v1355 = vand.u32 %v33, 4294901760
    %1356 = vmatpush.msra.mxu0 %v1355
    %v1357 = vand.u32 %v32, 4294901760
    %1358 = vmatpush.msra.mxu0 %v1357
    %v1359 = vand.u32 %v1237, 4294901760
    %v1360 = vsub.f32 %v1237, %v1359
    %v1361 = vand.u32 %v1360, 4294901760
    %1362 = vmatmul.f32.gmra.mxu0 %v1361
    %v1363 = vpop.f32.mrf.mxu0
    %v1364 = vadd.f32 %v1337, %v1363
    %1365 = vdwg.mxu0
    %1366 = vmatpush.msra.mxu0 0.0
    %1367 = vmatpush.msra.mxu0 0.0
    %1368 = vmatpush.msra.mxu0 0.0
    %1369 = vmatpush.msra.mxu0 0.0
    %1370 = vmatpush.msra.mxu0 0.0
    %1371 = vmatpush.msra.mxu0 0.0
    %1372 = vmatpush.msra.mxu0 0.0
    %1373 = vmatpush.msra.mxu0 0.0
    %1374 = vmatpush.msra.mxu0 0.0
    %1375 = vmatpush.msra.mxu0 0.0
    %1376 = vmatpush.msra.mxu0 0.0
    %1377 = vmatpush.msra.mxu0 0.0
    %v1378 = vand.u32 %v35, 4294901760
    %v1379 = vsub.f32 %v35, %v1378
    %v1380 = vand.u32 %v1379, 4294901760
    %1381 = vmatpush.msra.mxu0 %v1380
    %v1382 = vand.u32 %v34, 4294901760
    %v1383 = vsub.f32 %v34, %v1382
    %v1384 = vand.u32 %v1383, 4294901760
    %1385 = vmatpush.msra.mxu0 %v1384
    %v1386 = vand.u32 %v33, 4294901760
    %v1387 = vsub.f32 %v33, %v1386
    %v1388 = vand.u32 %v1387, 4294901760
    %1389 = vmatpush.msra.mxu0 %v1388
    %v1390 = vand.u32 %v32, 4294901760
    %v1391 = vsub.f32 %v32, %v1390
    %v1392 = vand.u32 %v1391, 4294901760
    %1393 = vmatpush.msra.mxu0 %v1392
    %v1394 = vand.u32 %v1237, 4294901760
    %1395 = vmatmul.f32.gmra.mxu0 %v1394
    %v1396 = vpop.f32.mrf.mxu0
    %v1397 = vadd.f32 %v1364, %v1396
    %1398 = vdwg.mxu0
    %1399 = vmatpush.msra.mxu0 0.0
    %1400 = vmatpush.msra.mxu0 0.0
    %1401 = vmatpush.msra.mxu0 0.0
    %1402 = vmatpush.msra.mxu0 0.0
    %1403 = vmatpush.msra.mxu0 0.0
    %1404 = vmatpush.msra.mxu0 0.0
    %1405 = vmatpush.msra.mxu0 0.0
    %1406 = vmatpush.msra.mxu0 0.0
    %1407 = vmatpush.msra.mxu0 0.0
    %1408 = vmatpush.msra.mxu0 0.0
    %1409 = vmatpush.msra.mxu0 0.0
    %1410 = vmatpush.msra.mxu0 0.0
    %v1411 = vand.u32 %v35, 4294901760
    %1412 = vmatpush.msra.mxu0 %v1411
    %v1413 = vand.u32 %v34, 4294901760
    %1414 = vmatpush.msra.mxu0 %v1413
    %v1415 = vand.u32 %v33, 4294901760
    %1416 = vmatpush.msra.mxu0 %v1415
    %v1417 = vand.u32 %v32, 4294901760
    %1418 = vmatpush.msra.mxu0 %v1417
    %v1419 = vand.u32 %v1237, 4294901760
    %1420 = vmatmul.f32.gmra.mxu0 %v1419
    %v1421 = vpop.f32.mrf.mxu0
    %v1422 = vadd.f32 %v1397, %v1421
    %1423 = vdwg.mxu0
    %v1424 = vadd.f32 %v278, %v1422
    %v1425 = vxor.u32 %v1424, 2147483648
    %v1426 = vmul.f32 %v1425, 1.442695
    %v1427 = vpow.pop %v1426
    %v1428 = vadd.f32 %v1427, 1.0
    %v1429 = vrcp.pop %v1428
    %v1430 = vmul.f32 %v1428, %v1429
    %v1431 = vsub.f32 1.0, %v1430
    %v1432 = vmul.f32 %v1429, %v1431
    %v1433 = vadd.f32 %v1429, %v1432
    %vm1434 = vweird.f32 %v1428
    %vm1435 = vweird.f32 %v1429
    %vm1436 = vmor %vm1434, %vm1435
    %v1437 = vsel %vm1436, %v1429, %v1433
    %v1438 = vand.u32 2147483647, %v1428
    %vm1439 = vcmp.eq.f32.partialorder %v1438, 8.507059e+37
    %v1440 = vand.u32 %v1428, 2147483648
    %v1441 = vor.u32 1.1754944e-38, %v1440
    %v1442 = vsel %vm1439, %v1441, %v1437
    %v1443 = vmul.f32 1.0, %v1442
    %v1444 = vmul.f32 %v1443, 2.0
    %v1445 = vsub.f32 %v1444, 1.0
    %v1447 = vrot.slane %v1222, 6
    %v1449 = vmul.f32 %v1443, %v1447
    %1451 = vrot.lane.b32.xlu0 %v1445, 64
    %v1452 = vpop.permute.xlu0 %1451
    %v1454 = vmul.f32 %v1443, %v1452
    %1456 = vrot.lane.b32.xlu0 %v1454, 32
    %v1457 = vpop.permute.xlu0 %1456
    %v1459 = vadd.f32 %v1449, %v1457
    %v1460 = vtanh.pop %v1459
    %1462 = vrot.lane.b32.xlu0 %v1460, 64
    %v1463 = vpop.permute.xlu0 %1462
    %v1465 = vmul.f32 %v1443, %v1463
    %vm1466 = vcmp.ne.s32.totalorder %v42, 0
    %v1467 = vsel %vm1466, 1, 0
    %1468 = vset.pattern.permute.xlu0 0
    %1469 = vperm.xlu0 %1468, %v1467
    %v1470 = vpop.permute.xlu0 %1469
    %vm1471 = vcmp.eq.s32.totalorder %v1470, 1
    %v1473 = vrot.slane %v1232, 6
    %v1475 = vsel %vm1471, %v1465, %v1473
    %1477 = vrot.lane.b32.xlu0 %v1465, 32
    %v1478 = vpop.permute.xlu0 %1477
    %v1479 = vsel %vm57, %v1478, 0
    %1481 = vmatpush.msra.mxu0 0.0
    %1482 = vmatpush.msra.mxu0 0.0
    %1483 = vmatpush.msra.mxu0 0.0
    %1484 = vmatpush.msra.mxu0 0.0
    %1485 = vmatpush.msra.mxu0 0.0
    %1486 = vmatpush.msra.mxu0 0.0
    %1487 = vmatpush.msra.mxu0 0.0
    %1488 = vmatpush.msra.mxu0 0.0
    %1489 = vmatpush.msra.mxu0 0.0
    %1490 = vmatpush.msra.mxu0 0.0
    %1491 = vmatpush.msra.mxu0 0.0
    %1492 = vmatpush.msra.mxu0 0.0
    %v1493 = vand.u32 %v35, 4294901760
    %1494 = vmatpush.msra.mxu0 %v1493
    %v1495 = vand.u32 %v34, 4294901760
    %1496 = vmatpush.msra.mxu0 %v1495
    %v1497 = vand.u32 %v33, 4294901760
    %1498 = vmatpush.msra.mxu0 %v1497
    %v1499 = vand.u32 %v32, 4294901760
    %1500 = vmatpush.msra.mxu0 %v1499
    %v1501 = vand.u32 %v1479, 4294901760
    %v1502 = vsub.f32 %v1479, %v1501
    %v1503 = vand.u32 %v1502, 4294901760
    %v1504 = vsub.f32 %v1502, %v1503
    %v1505 = vand.u32 %v1504, 4294901760
    %1506 = vmatmul.f32.gmra.mxu0 %v1505
    %v1507 = vpop.f32.mrf.mxu0
    %v1508 = vadd.f32 0.0, %v1507
    %1509 = vdwg.mxu0
    %1510 = vmatpush.msra.mxu0 0.0
    %1511 = vmatpush.msra.mxu0 0.0
    %1512 = vmatpush.msra.mxu0 0.0
    %1513 = vmatpush.msra.mxu0 0.0
    %1514 = vmatpush.msra.mxu0 0.0
    %1515 = vmatpush.msra.mxu0 0.0
    %1516 = vmatpush.msra.mxu0 0.0
    %1517 = vmatpush.msra.mxu0 0.0
    %1518 = vmatpush.msra.mxu0 0.0
    %1519 = vmatpush.msra.mxu0 0.0
    %1520 = vmatpush.msra.mxu0 0.0
    %1521 = vmatpush.msra.mxu0 0.0
    %v1522 = vand.u32 %v35, 4294901760
    %v1523 = vsub.f32 %v35, %v1522
    %v1524 = vand.u32 %v1523, 4294901760
    %v1525 = vsub.f32 %v1523, %v1524
    %v1526 = vand.u32 %v1525, 4294901760
    %1527 = vmatpush.msra.mxu0 %v1526
    %v1528 = vand.u32 %v34, 4294901760
    %v1529 = vsub.f32 %v34, %v1528
    %v1530 = vand.u32 %v1529, 4294901760
    %v1531 = vsub.f32 %v1529, %v1530
    %v1532 = vand.u32 %v1531, 4294901760
    %1533 = vmatpush.msra.mxu0 %v1532
    %v1534 = vand.u32 %v33, 4294901760
    %v1535 = vsub.f32 %v33, %v1534
    %v1536 = vand.u32 %v1535, 4294901760
    %v1537 = vsub.f32 %v1535, %v1536
    %v1538 = vand.u32 %v1537, 4294901760
    %1539 = vmatpush.msra.mxu0 %v1538
    %v1540 = vand.u32 %v32, 4294901760
    %v1541 = vsub.f32 %v32, %v1540
    %v1542 = vand.u32 %v1541, 4294901760
    %v1543 = vsub.f32 %v1541, %v1542
    %v1544 = vand.u32 %v1543, 4294901760
    %1545 = vmatpush.msra.mxu0 %v1544
    %v1546 = vand.u32 %v1479, 4294901760
    %1547 = vmatmul.f32.gmra.mxu0 %v1546
    %v1548 = vpop.f32.mrf.mxu0
    %v1549 = vadd.f32 %v1508, %v1548
    %1550 = vdwg.mxu0
    %1551 = vmatpush.msra.mxu0 0.0
    %1552 = vmatpush.msra.mxu0 0.0
    %1553 = vmatpush.msra.mxu0 0.0
    %1554 = vmatpush.msra.mxu0 0.0
    %1555 = vmatpush.msra.mxu0 0.0
    %1556 = vmatpush.msra.mxu0 0.0
    %1557 = vmatpush.msra.mxu0 0.0
    %1558 = vmatpush.msra.mxu0 0.0
    %1559 = vmatpush.msra.mxu0 0.0
    %1560 = vmatpush.msra.mxu0 0.0
    %1561 = vmatpush.msra.mxu0 0.0
    %1562 = vmatpush.msra.mxu0 0.0
    %v1563 = vand.u32 %v35, 4294901760
    %v1564 = vsub.f32 %v35, %v1563
    %1565 = vmatpush.msra.mxu0 %v1564
    %v1566 = vand.u32 %v34, 4294901760
    %v1567 = vsub.f32 %v34, %v1566
    %1568 = vmatpush.msra.mxu0 %v1567
    %v1569 = vand.u32 %v33, 4294901760
    %v1570 = vsub.f32 %v33, %v1569
    %1571 = vmatpush.msra.mxu0 %v1570
    %v1572 = vand.u32 %v32, 4294901760
    %v1573 = vsub.f32 %v32, %v1572
    %1574 = vmatpush.msra.mxu0 %v1573
    %v1575 = vand.u32 %v1479, 4294901760
    %v1576 = vsub.f32 %v1479, %v1575
    %1577 = vmatmul.f32.gmra.mxu0 %v1576
    %v1578 = vpop.f32.mrf.mxu0
    %v1579 = vadd.f32 %v1549, %v1578
    %1580 = vdwg.mxu0
    %1581 = vmatpush.msra.mxu0 0.0
    %1582 = vmatpush.msra.mxu0 0.0
    %1583 = vmatpush.msra.mxu0 0.0
    %1584 = vmatpush.msra.mxu0 0.0
    %1585 = vmatpush.msra.mxu0 0.0
    %1586 = vmatpush.msra.mxu0 0.0
    %1587 = vmatpush.msra.mxu0 0.0
    %1588 = vmatpush.msra.mxu0 0.0
    %1589 = vmatpush.msra.mxu0 0.0
    %1590 = vmatpush.msra.mxu0 0.0
    %1591 = vmatpush.msra.mxu0 0.0
    %1592 = vmatpush.msra.mxu0 0.0
    %v1593 = vand.u32 %v35, 4294901760
    %1594 = vmatpush.msra.mxu0 %v1593
    %v1595 = vand.u32 %v34, 4294901760
    %1596 = vmatpush.msra.mxu0 %v1595
    %v1597 = vand.u32 %v33, 4294901760
    %1598 = vmatpush.msra.mxu0 %v1597
    %v1599 = vand.u32 %v32, 4294901760
    %1600 = vmatpush.msra.mxu0 %v1599
    %v1601 = vand.u32 %v1479, 4294901760
    %v1602 = vsub.f32 %v1479, %v1601
    %v1603 = vand.u32 %v1602, 4294901760
    %1604 = vmatmul.f32.gmra.mxu0 %v1603
    %v1605 = vpop.f32.mrf.mxu0
    %v1606 = vadd.f32 %v1579, %v1605
    %1607 = vdwg.mxu0
    %1608 = vmatpush.msra.mxu0 0.0
    %1609 = vmatpush.msra.mxu0 0.0
    %1610 = vmatpush.msra.mxu0 0.0
    %1611 = vmatpush.msra.mxu0 0.0
    %1612 = vmatpush.msra.mxu0 0.0
    %1613 = vmatpush.msra.mxu0 0.0
    %1614 = vmatpush.msra.mxu0 0.0
    %1615 = vmatpush.msra.mxu0 0.0
    %1616 = vmatpush.msra.mxu0 0.0
    %1617 = vmatpush.msra.mxu0 0.0
    %1618 = vmatpush.msra.mxu0 0.0
    %1619 = vmatpush.msra.mxu0 0.0
    %v1620 = vand.u32 %v35, 4294901760
    %v1621 = vsub.f32 %v35, %v1620
    %v1622 = vand.u32 %v1621, 4294901760
    %1623 = vmatpush.msra.mxu0 %v1622
    %v1624 = vand.u32 %v34, 4294901760
    %v1625 = vsub.f32 %v34, %v1624
    %v1626 = vand.u32 %v1625, 4294901760
    %1627 = vmatpush.msra.mxu0 %v1626
    %v1628 = vand.u32 %v33, 4294901760
    %v1629 = vsub.f32 %v33, %v1628
    %v1630 = vand.u32 %v1629, 4294901760
    %1631 = vmatpush.msra.mxu0 %v1630
    %v1632 = vand.u32 %v32, 4294901760
    %v1633 = vsub.f32 %v32, %v1632
    %v1634 = vand.u32 %v1633, 4294901760
    %1635 = vmatpush.msra.mxu0 %v1634
    %v1636 = vand.u32 %v1479, 4294901760
    %1637 = vmatmul.f32.gmra.mxu0 %v1636
    %v1638 = vpop.f32.mrf.mxu0
    %v1639 = vadd.f32 %v1606, %v1638
    %1640 = vdwg.mxu0
    %1641 = vmatpush.msra.mxu0 0.0
    %1642 = vmatpush.msra.mxu0 0.0
    %1643 = vmatpush.msra.mxu0 0.0
    %1644 = vmatpush.msra.mxu0 0.0
    %1645 = vmatpush.msra.mxu0 0.0
    %1646 = vmatpush.msra.mxu0 0.0
    %1647 = vmatpush.msra.mxu0 0.0
    %1648 = vmatpush.msra.mxu0 0.0
    %1649 = vmatpush.msra.mxu0 0.0
    %1650 = vmatpush.msra.mxu0 0.0
    %1651 = vmatpush.msra.mxu0 0.0
    %1652 = vmatpush.msra.mxu0 0.0
    %v1653 = vand.u32 %v35, 4294901760
    %1654 = vmatpush.msra.mxu0 %v1653
    %v1655 = vand.u32 %v34, 4294901760
    %1656 = vmatpush.msra.mxu0 %v1655
    %v1657 = vand.u32 %v33, 4294901760
    %1658 = vmatpush.msra.mxu0 %v1657
    %v1659 = vand.u32 %v32, 4294901760
    %1660 = vmatpush.msra.mxu0 %v1659
    %v1661 = vand.u32 %v1479, 4294901760
    %1662 = vmatmul.f32.gmra.mxu0 %v1661
    %v1663 = vpop.f32.mrf.mxu0
    %v1664 = vadd.f32 %v1639, %v1663
    %1665 = vdwg.mxu0
    %v1667 = vrot.slane %v1664, 6
    %v1669 = vadd.f32 %v278, %v1667
    %v1670 = vxor.u32 %v1669, 2147483648
    %v1671 = vmul.f32 %v1670, 1.442695
    %v1672 = vpow.pop %v1671
    %v1673 = vadd.f32 %v1672, 1.0
    %v1674 = vrcp.pop %v1673
    %v1675 = vmul.f32 %v1673, %v1674
    %v1676 = vsub.f32 1.0, %v1675
    %v1677 = vmul.f32 %v1674, %v1676
    %v1678 = vadd.f32 %v1674, %v1677
    %vm1679 = vweird.f32 %v1673
    %vm1680 = vweird.f32 %v1674
    %vm1681 = vmor %vm1679, %vm1680
    %v1682 = vsel %vm1681, %v1674, %v1678
    %v1683 = vand.u32 2147483647, %v1673
    %vm1684 = vcmp.eq.f32.partialorder %v1683, 8.507059e+37
    %v1685 = vand.u32 %v1673, 2147483648
    %v1686 = vor.u32 1.1754944e-38, %v1685
    %v1687 = vsel %vm1684, %v1686, %v1682
    %v1688 = vmul.f32 1.0, %v1687
    %v1689 = vmul.f32 %v1688, 2.0
    %v1690 = vsub.f32 %v1689, 1.0
    %v1692 = vrot.slane %v1459, 6
    %v1694 = vmul.f32 %v1688, %v1692
    %1696 = vrot.lane.b32.xlu0 %v1690, 64
    %v1697 = vpop.permute.xlu0 %1696
    %v1699 = vmul.f32 %v1688, %v1697
    %1701 = vrot.lane.b32.xlu0 %v1699, 32
    %v1702 = vpop.permute.xlu0 %1701
    %v1704 = vadd.f32 %v1694, %v1702
    %v1705 = vtanh.pop %v1704
    %1707 = vrot.lane.b32.xlu0 %v1705, 64
    %v1708 = vpop.permute.xlu0 %1707
    %v1710 = vmul.f32 %v1688, %v1708
    %v1712 = vrot.slane %v1475, 6
    %v1714 = vsel %vm1471, %v1710, %v1712
    %v1716 = vrot.slane %v1710, 2
    %1717 = vrot.lane.b32.xlu0 %v1716, 32
    %v1718 = vpop.permute.xlu0 %1717
    %v1719 = vsel %vm57, %v1718, 0
    %1721 = vmatpush.msra.mxu0 0.0
    %1722 = vmatpush.msra.mxu0 0.0
    %1723 = vmatpush.msra.mxu0 0.0
    %1724 = vmatpush.msra.mxu0 0.0
    %1725 = vmatpush.msra.mxu0 0.0
    %1726 = vmatpush.msra.mxu0 0.0
    %1727 = vmatpush.msra.mxu0 0.0
    %1728 = vmatpush.msra.mxu0 0.0
    %1729 = vmatpush.msra.mxu0 0.0
    %1730 = vmatpush.msra.mxu0 0.0
    %1731 = vmatpush.msra.mxu0 0.0
    %1732 = vmatpush.msra.mxu0 0.0
    %v1733 = vand.u32 %v35, 4294901760
    %1734 = vmatpush.msra.mxu0 %v1733
    %v1735 = vand.u32 %v34, 4294901760
    %1736 = vmatpush.msra.mxu0 %v1735
    %v1737 = vand.u32 %v33, 4294901760
    %1738 = vmatpush.msra.mxu0 %v1737
    %v1739 = vand.u32 %v32, 4294901760
    %1740 = vmatpush.msra.mxu0 %v1739
    %v1741 = vand.u32 %v1719, 4294901760
    %v1742 = vsub.f32 %v1719, %v1741
    %v1743 = vand.u32 %v1742, 4294901760
    %v1744 = vsub.f32 %v1742, %v1743
    %v1745 = vand.u32 %v1744, 4294901760
    %1746 = vmatmul.f32.gmra.mxu0 %v1745
    %v1747 = vpop.f32.mrf.mxu0
    %v1748 = vadd.f32 0.0, %v1747
    %1749 = vdwg.mxu0
    %1750 = vmatpush.msra.mxu0 0.0
    %1751 = vmatpush.msra.mxu0 0.0
    %1752 = vmatpush.msra.mxu0 0.0
    %1753 = vmatpush.msra.mxu0 0.0
    %1754 = vmatpush.msra.mxu0 0.0
    %1755 = vmatpush.msra.mxu0 0.0
    %1756 = vmatpush.msra.mxu0 0.0
    %1757 = vmatpush.msra.mxu0 0.0
    %1758 = vmatpush.msra.mxu0 0.0
    %1759 = vmatpush.msra.mxu0 0.0
    %1760 = vmatpush.msra.mxu0 0.0
    %1761 = vmatpush.msra.mxu0 0.0
    %v1762 = vand.u32 %v35, 4294901760
    %v1763 = vsub.f32 %v35, %v1762
    %v1764 = vand.u32 %v1763, 4294901760
    %v1765 = vsub.f32 %v1763, %v1764
    %v1766 = vand.u32 %v1765, 4294901760
    %1767 = vmatpush.msra.mxu0 %v1766
    %v1768 = vand.u32 %v34, 4294901760
    %v1769 = vsub.f32 %v34, %v1768
    %v1770 = vand.u32 %v1769, 4294901760
    %v1771 = vsub.f32 %v1769, %v1770
    %v1772 = vand.u32 %v1771, 4294901760
    %1773 = vmatpush.msra.mxu0 %v1772
    %v1774 = vand.u32 %v33, 4294901760
    %v1775 = vsub.f32 %v33, %v1774
    %v1776 = vand.u32 %v1775, 4294901760
    %v1777 = vsub.f32 %v1775, %v1776
    %v1778 = vand.u32 %v1777, 4294901760
    %1779 = vmatpush.msra.mxu0 %v1778
    %v1780 = vand.u32 %v32, 4294901760
    %v1781 = vsub.f32 %v32, %v1780
    %v1782 = vand.u32 %v1781, 4294901760
    %v1783 = vsub.f32 %v1781, %v1782
    %v1784 = vand.u32 %v1783, 4294901760
    %1785 = vmatpush.msra.mxu0 %v1784
    %v1786 = vand.u32 %v1719, 4294901760
    %1787 = vmatmul.f32.gmra.mxu0 %v1786
    %v1788 = vpop.f32.mrf.mxu0
    %v1789 = vadd.f32 %v1748, %v1788
    %1790 = vdwg.mxu0
    %1791 = vmatpush.msra.mxu0 0.0
    %1792 = vmatpush.msra.mxu0 0.0
    %1793 = vmatpush.msra.mxu0 0.0
    %1794 = vmatpush.msra.mxu0 0.0
    %1795 = vmatpush.msra.mxu0 0.0
    %1796 = vmatpush.msra.mxu0 0.0
    %1797 = vmatpush.msra.mxu0 0.0
    %1798 = vmatpush.msra.mxu0 0.0
    %1799 = vmatpush.msra.mxu0 0.0
    %1800 = vmatpush.msra.mxu0 0.0
    %1801 = vmatpush.msra.mxu0 0.0
    %1802 = vmatpush.msra.mxu0 0.0
    %v1803 = vand.u32 %v35, 4294901760
    %v1804 = vsub.f32 %v35, %v1803
    %1805 = vmatpush.msra.mxu0 %v1804
    %v1806 = vand.u32 %v34, 4294901760
    %v1807 = vsub.f32 %v34, %v1806
    %1808 = vmatpush.msra.mxu0 %v1807
    %v1809 = vand.u32 %v33, 4294901760
    %v1810 = vsub.f32 %v33, %v1809
    %1811 = vmatpush.msra.mxu0 %v1810
    %v1812 = vand.u32 %v32, 4294901760
    %v1813 = vsub.f32 %v32, %v1812
    %1814 = vmatpush.msra.mxu0 %v1813
    %v1815 = vand.u32 %v1719, 4294901760
    %v1816 = vsub.f32 %v1719, %v1815
    %1817 = vmatmul.f32.gmra.mxu0 %v1816
    %v1818 = vpop.f32.mrf.mxu0
    %v1819 = vadd.f32 %v1789, %v1818
    %1820 = vdwg.mxu0
    %1821 = vmatpush.msra.mxu0 0.0
    %1822 = vmatpush.msra.mxu0 0.0
    %1823 = vmatpush.msra.mxu0 0.0
    %1824 = vmatpush.msra.mxu0 0.0
    %1825 = vmatpush.msra.mxu0 0.0
    %1826 = vmatpush.msra.mxu0 0.0
    %1827 = vmatpush.msra.mxu0 0.0
    %1828 = vmatpush.msra.mxu0 0.0
    %1829 = vmatpush.msra.mxu0 0.0
    %1830 = vmatpush.msra.mxu0 0.0
    %1831 = vmatpush.msra.mxu0 0.0
    %1832 = vmatpush.msra.mxu0 0.0
    %v1833 = vand.u32 %v35, 4294901760
    %1834 = vmatpush.msra.mxu0 %v1833
    %v1835 = vand.u32 %v34, 4294901760
    %1836 = vmatpush.msra.mxu0 %v1835
    %v1837 = vand.u32 %v33, 4294901760
    %1838 = vmatpush.msra.mxu0 %v1837
    %v1839 = vand.u32 %v32, 4294901760
    %1840 = vmatpush.msra.mxu0 %v1839
    %v1841 = vand.u32 %v1719, 4294901760
    %v1842 = vsub.f32 %v1719, %v1841
    %v1843 = vand.u32 %v1842, 4294901760
    %1844 = vmatmul.f32.gmra.mxu0 %v1843
    %v1845 = vpop.f32.mrf.mxu0
    %v1846 = vadd.f32 %v1819, %v1845
    %1847 = vdwg.mxu0
    %1848 = vmatpush.msra.mxu0 0.0
    %1849 = vmatpush.msra.mxu0 0.0
    %1850 = vmatpush.msra.mxu0 0.0
    %1851 = vmatpush.msra.mxu0 0.0
    %1852 = vmatpush.msra.mxu0 0.0
    %1853 = vmatpush.msra.mxu0 0.0
    %1854 = vmatpush.msra.mxu0 0.0
    %1855 = vmatpush.msra.mxu0 0.0
    %1856 = vmatpush.msra.mxu0 0.0
    %1857 = vmatpush.msra.mxu0 0.0
    %1858 = vmatpush.msra.mxu0 0.0
    %1859 = vmatpush.msra.mxu0 0.0
    %v1860 = vand.u32 %v35, 4294901760
    %v1861 = vsub.f32 %v35, %v1860
    %v1862 = vand.u32 %v1861, 4294901760
    %1863 = vmatpush.msra.mxu0 %v1862
    %v1864 = vand.u32 %v34, 4294901760
    %v1865 = vsub.f32 %v34, %v1864
    %v1866 = vand.u32 %v1865, 4294901760
    %1867 = vmatpush.msra.mxu0 %v1866
    %v1868 = vand.u32 %v33, 4294901760
    %v1869 = vsub.f32 %v33, %v1868
    %v1870 = vand.u32 %v1869, 4294901760
    %1871 = vmatpush.msra.mxu0 %v1870
    %v1872 = vand.u32 %v32, 4294901760
    %v1873 = vsub.f32 %v32, %v1872
    %v1874 = vand.u32 %v1873, 4294901760
    %1875 = vmatpush.msra.mxu0 %v1874
    %v1876 = vand.u32 %v1719, 4294901760
    %1877 = vmatmul.f32.gmra.mxu0 %v1876
    %v1878 = vpop.f32.mrf.mxu0
    %v1879 = vadd.f32 %v1846, %v1878
    %1880 = vdwg.mxu0
    %1881 = vmatpush.msra.mxu0 0.0
    %1882 = vmatpush.msra.mxu0 0.0
    %1883 = vmatpush.msra.mxu0 0.0
    %1884 = vmatpush.msra.mxu0 0.0
    %1885 = vmatpush.msra.mxu0 0.0
    %1886 = vmatpush.msra.mxu0 0.0
    %1887 = vmatpush.msra.mxu0 0.0
    %1888 = vmatpush.msra.mxu0 0.0
    %1889 = vmatpush.msra.mxu0 0.0
    %1890 = vmatpush.msra.mxu0 0.0
    %1891 = vmatpush.msra.mxu0 0.0
    %1892 = vmatpush.msra.mxu0 0.0
    %v1893 = vand.u32 %v35, 4294901760
    %1894 = vmatpush.msra.mxu0 %v1893
    %v1895 = vand.u32 %v34, 4294901760
    %1896 = vmatpush.msra.mxu0 %v1895
    %v1897 = vand.u32 %v33, 4294901760
    %1898 = vmatpush.msra.mxu0 %v1897
    %v1899 = vand.u32 %v32, 4294901760
    %1900 = vmatpush.msra.mxu0 %v1899
    %v1901 = vand.u32 %v1719, 4294901760
    %1902 = vmatmul.f32.gmra.mxu0 %v1901
    %v1903 = vpop.f32.mrf.mxu0
    %v1904 = vadd.f32 %v1879, %v1903
    %1905 = vdwg.mxu0
    %v1907 = vrot.slane %v1904, 4
    %v1909 = vadd.f32 %v278, %v1907
    %v1910 = vxor.u32 %v1909, 2147483648
    %v1911 = vmul.f32 %v1910, 1.442695
    %v1912 = vpow.pop %v1911
    %v1913 = vadd.f32 %v1912, 1.0
    %v1914 = vrcp.pop %v1913
    %v1915 = vmul.f32 %v1913, %v1914
    %v1916 = vsub.f32 1.0, %v1915
    %v1917 = vmul.f32 %v1914, %v1916
    %v1918 = vadd.f32 %v1914, %v1917
    %vm1919 = vweird.f32 %v1913
    %vm1920 = vweird.f32 %v1914
    %vm1921 = vmor %vm1919, %vm1920
    %v1922 = vsel %vm1921, %v1914, %v1918
    %v1923 = vand.u32 2147483647, %v1913
    %vm1924 = vcmp.eq.f32.partialorder %v1923, 8.507059e+37
    %v1925 = vand.u32 %v1913, 2147483648
    %v1926 = vor.u32 1.1754944e-38, %v1925
    %v1927 = vsel %vm1924, %v1926, %v1922
    %v1928 = vmul.f32 1.0, %v1927
    %v1929 = vmul.f32 %v1928, 2.0
    %v1930 = vsub.f32 %v1929, 1.0
    %v1932 = vrot.slane %v1704, 6
    %v1934 = vmul.f32 %v1928, %v1932
    %1936 = vrot.lane.b32.xlu0 %v1930, 64
    %v1937 = vpop.permute.xlu0 %1936
    %v1939 = vmul.f32 %v1928, %v1937
    %1941 = vrot.lane.b32.xlu0 %v1939, 32
    %v1942 = vpop.permute.xlu0 %1941
    %v1944 = vadd.f32 %v1934, %v1942
    %v1945 = vtanh.pop %v1944
    %1947 = vrot.lane.b32.xlu0 %v1945, 64
    %v1948 = vpop.permute.xlu0 %1947
    %v1950 = vmul.f32 %v1928, %v1948
    %v1952 = vrot.slane %v1714, 6
    %v1954 = vsel %vm1471, %v1950, %v1952
    %v1956 = vrot.slane %v1950, 4
    %1957 = vrot.lane.b32.xlu0 %v1956, 32
    %v1958 = vpop.permute.xlu0 %1957
    %v1959 = vsel %vm57, %v1958, 0
    %1961 = vmatpush.msra.mxu0 0.0
    %1962 = vmatpush.msra.mxu0 0.0
    %1963 = vmatpush.msra.mxu0 0.0
    %1964 = vmatpush.msra.mxu0 0.0
    %1965 = vmatpush.msra.mxu0 0.0
    %1966 = vmatpush.msra.mxu0 0.0
    %1967 = vmatpush.msra.mxu0 0.0
    %1968 = vmatpush.msra.mxu0 0.0
    %1969 = vmatpush.msra.mxu0 0.0
    %1970 = vmatpush.msra.mxu0 0.0
    %1971 = vmatpush.msra.mxu0 0.0
    %1972 = vmatpush.msra.mxu0 0.0
    %v1973 = vand.u32 %v35, 4294901760
    %1974 = vmatpush.msra.mxu0 %v1973
    %v1975 = vand.u32 %v34, 4294901760
    %1976 = vmatpush.msra.mxu0 %v1975
    %v1977 = vand.u32 %v33, 4294901760
    %1978 = vmatpush.msra.mxu0 %v1977
    %v1979 = vand.u32 %v32, 4294901760
    %1980 = vmatpush.msra.mxu0 %v1979
    %v1981 = vand.u32 %v1959, 4294901760
    %v1982 = vsub.f32 %v1959, %v1981
    %v1983 = vand.u32 %v1982, 4294901760
    %v1984 = vsub.f32 %v1982, %v1983
    %v1985 = vand.u32 %v1984, 4294901760
    %1986 = vmatmul.f32.gmra.mxu0 %v1985
    %v1987 = vpop.f32.mrf.mxu0
    %v1988 = vadd.f32 0.0, %v1987
    %1989 = vdwg.mxu0
    %1990 = vmatpush.msra.mxu0 0.0
    %1991 = vmatpush.msra.mxu0 0.0
    %1992 = vmatpush.msra.mxu0 0.0
    %1993 = vmatpush.msra.mxu0 0.0
    %1994 = vmatpush.msra.mxu0 0.0
    %1995 = vmatpush.msra.mxu0 0.0
    %1996 = vmatpush.msra.mxu0 0.0
    %1997 = vmatpush.msra.mxu0 0.0
    %1998 = vmatpush.msra.mxu0 0.0
    %1999 = vmatpush.msra.mxu0 0.0
    %2000 = vmatpush.msra.mxu0 0.0
    %2001 = vmatpush.msra.mxu0 0.0
    %v2002 = vand.u32 %v35, 4294901760
    %v2003 = vsub.f32 %v35, %v2002
    %v2004 = vand.u32 %v2003, 4294901760
    %v2005 = vsub.f32 %v2003, %v2004
    %v2006 = vand.u32 %v2005, 4294901760
    %2007 = vmatpush.msra.mxu0 %v2006
    %v2008 = vand.u32 %v34, 4294901760
    %v2009 = vsub.f32 %v34, %v2008
    %v2010 = vand.u32 %v2009, 4294901760
    %v2011 = vsub.f32 %v2009, %v2010
    %v2012 = vand.u32 %v2011, 4294901760
    %2013 = vmatpush.msra.mxu0 %v2012
    %v2014 = vand.u32 %v33, 4294901760
    %v2015 = vsub.f32 %v33, %v2014
    %v2016 = vand.u32 %v2015, 4294901760
    %v2017 = vsub.f32 %v2015, %v2016
    %v2018 = vand.u32 %v2017, 4294901760
    %2019 = vmatpush.msra.mxu0 %v2018
    %v2020 = vand.u32 %v32, 4294901760
    %v2021 = vsub.f32 %v32, %v2020
    %v2022 = vand.u32 %v2021, 4294901760
    %v2023 = vsub.f32 %v2021, %v2022
    %v2024 = vand.u32 %v2023, 4294901760
    %2025 = vmatpush.msra.mxu0 %v2024
    %v2026 = vand.u32 %v1959, 4294901760
    %2027 = vmatmul.f32.gmra.mxu0 %v2026
    %v2028 = vpop.f32.mrf.mxu0
    %v2029 = vadd.f32 %v1988, %v2028
    %2030 = vdwg.mxu0
    %2031 = vmatpush.msra.mxu0 0.0
    %2032 = vmatpush.msra.mxu0 0.0
    %2033 = vmatpush.msra.mxu0 0.0
    %2034 = vmatpush.msra.mxu0 0.0
    %2035 = vmatpush.msra.mxu0 0.0
    %2036 = vmatpush.msra.mxu0 0.0
    %2037 = vmatpush.msra.mxu0 0.0
    %2038 = vmatpush.msra.mxu0 0.0
    %2039 = vmatpush.msra.mxu0 0.0
    %2040 = vmatpush.msra.mxu0 0.0
    %2041 = vmatpush.msra.mxu0 0.0
    %2042 = vmatpush.msra.mxu0 0.0
    %v2043 = vand.u32 %v35, 4294901760
    %v2044 = vsub.f32 %v35, %v2043
    %2045 = vmatpush.msra.mxu0 %v2044
    %v2046 = vand.u32 %v34, 4294901760
    %v2047 = vsub.f32 %v34, %v2046
    %2048 = vmatpush.msra.mxu0 %v2047
    %v2049 = vand.u32 %v33, 4294901760
    %v2050 = vsub.f32 %v33, %v2049
    %2051 = vmatpush.msra.mxu0 %v2050
    %v2052 = vand.u32 %v32, 4294901760
    %v2053 = vsub.f32 %v32, %v2052
    %2054 = vmatpush.msra.mxu0 %v2053
    %v2055 = vand.u32 %v1959, 4294901760
    %v2056 = vsub.f32 %v1959, %v2055
    %2057 = vmatmul.f32.gmra.mxu0 %v2056
    %v2058 = vpop.f32.mrf.mxu0
    %v2059 = vadd.f32 %v2029, %v2058
    %2060 = vdwg.mxu0
    %2061 = vmatpush.msra.mxu0 0.0
    %2062 = vmatpush.msra.mxu0 0.0
    %2063 = vmatpush.msra.mxu0 0.0
    %2064 = vmatpush.msra.mxu0 0.0
    %2065 = vmatpush.msra.mxu0 0.0
    %2066 = vmatpush.msra.mxu0 0.0
    %2067 = vmatpush.msra.mxu0 0.0
    %2068 = vmatpush.msra.mxu0 0.0
    %2069 = vmatpush.msra.mxu0 0.0
    %2070 = vmatpush.msra.mxu0 0.0
    %2071 = vmatpush.msra.mxu0 0.0
    %2072 = vmatpush.msra.mxu0 0.0
    %v2073 = vand.u32 %v35, 4294901760
    %2074 = vmatpush.msra.mxu0 %v2073
    %v2075 = vand.u32 %v34, 4294901760
    %2076 = vmatpush.msra.mxu0 %v2075
    %v2077 = vand.u32 %v33, 4294901760
    %2078 = vmatpush.msra.mxu0 %v2077
    %v2079 = vand.u32 %v32, 4294901760
    %2080 = vmatpush.msra.mxu0 %v2079
    %v2081 = vand.u32 %v1959, 4294901760
    %v2082 = vsub.f32 %v1959, %v2081
    %v2083 = vand.u32 %v2082, 4294901760
    %2084 = vmatmul.f32.gmra.mxu0 %v2083
    %v2085 = vpop.f32.mrf.mxu0
    %v2086 = vadd.f32 %v2059, %v2085
    %2087 = vdwg.mxu0
    %2088 = vmatpush.msra.mxu0 0.0
    %2089 = vmatpush.msra.mxu0 0.0
    %2090 = vmatpush.msra.mxu0 0.0
    %2091 = vmatpush.msra.mxu0 0.0
    %2092 = vmatpush.msra.mxu0 0.0
    %2093 = vmatpush.msra.mxu0 0.0
    %2094 = vmatpush.msra.mxu0 0.0
    %2095 = vmatpush.msra.mxu0 0.0
    %2096 = vmatpush.msra.mxu0 0.0
    %2097 = vmatpush.msra.mxu0 0.0
    %2098 = vmatpush.msra.mxu0 0.0
    %2099 = vmatpush.msra.mxu0 0.0
    %v2100 = vand.u32 %v35, 4294901760
    %v2101 = vsub.f32 %v35, %v2100
    %v2102 = vand.u32 %v2101, 4294901760
    %2103 = vmatpush.msra.mxu0 %v2102
    %v2104 = vand.u32 %v34, 4294901760
    %v2105 = vsub.f32 %v34, %v2104
    %v2106 = vand.u32 %v2105, 4294901760
    %2107 = vmatpush.msra.mxu0 %v2106
    %v2108 = vand.u32 %v33, 4294901760
    %v2109 = vsub.f32 %v33, %v2108
    %v2110 = vand.u32 %v2109, 4294901760
    %2111 = vmatpush.msra.mxu0 %v2110
    %v2112 = vand.u32 %v32, 4294901760
    %v2113 = vsub.f32 %v32, %v2112
    %v2114 = vand.u32 %v2113, 4294901760
    %2115 = vmatpush.msra.mxu0 %v2114
    %v2116 = vand.u32 %v1959, 4294901760
    %2117 = vmatmul.f32.gmra.mxu0 %v2116
    %v2118 = vpop.f32.mrf.mxu0
    %v2119 = vadd.f32 %v2086, %v2118
    %2120 = vdwg.mxu0
    %2121 = vmatpush.msra.mxu0 0.0
    %2122 = vmatpush.msra.mxu0 0.0
    %2123 = vmatpush.msra.mxu0 0.0
    %2124 = vmatpush.msra.mxu0 0.0
    %2125 = vmatpush.msra.mxu0 0.0
    %2126 = vmatpush.msra.mxu0 0.0
    %2127 = vmatpush.msra.mxu0 0.0
    %2128 = vmatpush.msra.mxu0 0.0
    %2129 = vmatpush.msra.mxu0 0.0
    %2130 = vmatpush.msra.mxu0 0.0
    %2131 = vmatpush.msra.mxu0 0.0
    %2132 = vmatpush.msra.mxu0 0.0
    %v2133 = vand.u32 %v35, 4294901760
    %2134 = vmatpush.msra.mxu0 %v2133
    %v2135 = vand.u32 %v34, 4294901760
    %2136 = vmatpush.msra.mxu0 %v2135
    %v2137 = vand.u32 %v33, 4294901760
    %2138 = vmatpush.msra.mxu0 %v2137
    %v2139 = vand.u32 %v32, 4294901760
    %2140 = vmatpush.msra.mxu0 %v2139
    %v2141 = vand.u32 %v1959, 4294901760
    %2142 = vmatmul.f32.gmra.mxu0 %v2141
    %v2143 = vpop.f32.mrf.mxu0
    %v2144 = vadd.f32 %v2119, %v2143
    %2145 = vdwg.mxu0
    %v2147 = vrot.slane %v2144, 2
    %v2149 = vadd.f32 %v278, %v2147
    %v2150 = vxor.u32 %v2149, 2147483648
    %v2151 = vmul.f32 %v2150, 1.442695
    %v2152 = vpow.pop %v2151
    %v2153 = vadd.f32 %v2152, 1.0
    %v2154 = vrcp.pop %v2153
    %v2155 = vmul.f32 %v2153, %v2154
    %v2156 = vsub.f32 1.0, %v2155
    %v2157 = vmul.f32 %v2154, %v2156
    %v2158 = vadd.f32 %v2154, %v2157
    %vm2159 = vweird.f32 %v2153
    %vm2160 = vweird.f32 %v2154
    %vm2161 = vmor %vm2159, %vm2160
    %v2162 = vsel %vm2161, %v2154, %v2158
    %v2163 = vand.u32 2147483647, %v2153
    %vm2164 = vcmp.eq.f32.partialorder %v2163, 8.507059e+37
    %v2165 = vand.u32 %v2153, 2147483648
    %v2166 = vor.u32 1.1754944e-38, %v2165
    %v2167 = vsel %vm2164, %v2166, %v2162
    %v2168 = vmul.f32 1.0, %v2167
    %v2169 = vmul.f32 %v2168, 2.0
    %v2170 = vsub.f32 %v2169, 1.0
    %v2172 = vrot.slane %v1944, 6
    %v2174 = vmul.f32 %v2168, %v2172
    %2176 = vrot.lane.b32.xlu0 %v2170, 64
    %v2177 = vpop.permute.xlu0 %2176
    %v2179 = vmul.f32 %v2168, %v2177
    %2181 = vrot.lane.b32.xlu0 %v2179, 32
    %v2182 = vpop.permute.xlu0 %2181
    %v2184 = vadd.f32 %v2174, %v2182
    %v2185 = vtanh.pop %v2184
    %2187 = vrot.lane.b32.xlu0 %v2185, 64
    %v2188 = vpop.permute.xlu0 %2187
    %v2190 = vmul.f32 %v2168, %v2188
    %v2192 = vrot.slane %v1954, 6
    %v2194 = vsel %vm1471, %v2190, %v2192
    %v2195 = vperm.slane %v40, 0
    %v2197 = vrot.slane %v2194, 6
    %2198 = vrot.lane.b32.xlu0 %v2197, 32
    %v2199 = vpop.permute.xlu0 %2198
    %v2200 = vsel %vm57, %v2199, 0
    %2202 = vmatpush.msra.mxu0 0.0
    %2203 = vmatpush.msra.mxu0 0.0
    %2204 = vmatpush.msra.mxu0 0.0
    %2205 = vmatpush.msra.mxu0 0.0
    %2206 = vmatpush.msra.mxu0 0.0
    %2207 = vmatpush.msra.mxu0 0.0
    %2208 = vmatpush.msra.mxu0 0.0
    %2209 = vmatpush.msra.mxu0 0.0
    %2210 = vmatpush.msra.mxu0 0.0
    %2211 = vmatpush.msra.mxu0 0.0
    %2212 = vmatpush.msra.mxu0 0.0
    %2213 = vmatpush.msra.mxu0 0.0
    %v2214 = vand.u32 %v39, 4294901760
    %2215 = vmatpush.msra.mxu0 %v2214
    %v2216 = vand.u32 %v38, 4294901760
    %2217 = vmatpush.msra.mxu0 %v2216
    %v2218 = vand.u32 %v37, 4294901760
    %2219 = vmatpush.msra.mxu0 %v2218
    %v2220 = vand.u32 %v36, 4294901760
    %2221 = vmatpush.msra.mxu0 %v2220
    %v2222 = vand.u32 %v2200, 4294901760
    %v2223 = vsub.f32 %v2200, %v2222
    %v2224 = vand.u32 %v2223, 4294901760
    %v2225 = vsub.f32 %v2223, %v2224
    %v2226 = vand.u32 %v2225, 4294901760
    %2227 = vmatmul.f32.gmra.mxu0 %v2226
    %v2228 = vpop.f32.mrf.mxu0
    %v2229 = vadd.f32 %v2195, %v2228
    %2230 = vdwg.mxu0
    %2231 = vmatpush.msra.mxu0 0.0
    %2232 = vmatpush.msra.mxu0 0.0
    %2233 = vmatpush.msra.mxu0 0.0
    %2234 = vmatpush.msra.mxu0 0.0
    %2235 = vmatpush.msra.mxu0 0.0
    %2236 = vmatpush.msra.mxu0 0.0
    %2237 = vmatpush.msra.mxu0 0.0
    %2238 = vmatpush.msra.mxu0 0.0
    %2239 = vmatpush.msra.mxu0 0.0
    %2240 = vmatpush.msra.mxu0 0.0
    %2241 = vmatpush.msra.mxu0 0.0
    %2242 = vmatpush.msra.mxu0 0.0
    %v2243 = vand.u32 %v39, 4294901760
    %v2244 = vsub.f32 %v39, %v2243
    %v2245 = vand.u32 %v2244, 4294901760
    %v2246 = vsub.f32 %v2244, %v2245
    %v2247 = vand.u32 %v2246, 4294901760
    %2248 = vmatpush.msra.mxu0 %v2247
    %v2249 = vand.u32 %v38, 4294901760
    %v2250 = vsub.f32 %v38, %v2249
    %v2251 = vand.u32 %v2250, 4294901760
    %v2252 = vsub.f32 %v2250, %v2251
    %v2253 = vand.u32 %v2252, 4294901760
    %2254 = vmatpush.msra.mxu0 %v2253
    %v2255 = vand.u32 %v37, 4294901760
    %v2256 = vsub.f32 %v37, %v2255
    %v2257 = vand.u32 %v2256, 4294901760
    %v2258 = vsub.f32 %v2256, %v2257
    %v2259 = vand.u32 %v2258, 4294901760
    %2260 = vmatpush.msra.mxu0 %v2259
    %v2261 = vand.u32 %v36, 4294901760
    %v2262 = vsub.f32 %v36, %v2261
    %v2263 = vand.u32 %v2262, 4294901760
    %v2264 = vsub.f32 %v2262, %v2263
    %v2265 = vand.u32 %v2264, 4294901760
    %2266 = vmatpush.msra.mxu0 %v2265
    %v2267 = vand.u32 %v2200, 4294901760
    %2268 = vmatmul.f32.gmra.mxu0 %v2267
    %v2269 = vpop.f32.mrf.mxu0
    %v2270 = vadd.f32 %v2229, %v2269
    %2271 = vdwg.mxu0
    %2272 = vmatpush.msra.mxu0 0.0
    %2273 = vmatpush.msra.mxu0 0.0
    %2274 = vmatpush.msra.mxu0 0.0
    %2275 = vmatpush.msra.mxu0 0.0
    %2276 = vmatpush.msra.mxu0 0.0
    %2277 = vmatpush.msra.mxu0 0.0
    %2278 = vmatpush.msra.mxu0 0.0
    %2279 = vmatpush.msra.mxu0 0.0
    %2280 = vmatpush.msra.mxu0 0.0
    %2281 = vmatpush.msra.mxu0 0.0
    %2282 = vmatpush.msra.mxu0 0.0
    %2283 = vmatpush.msra.mxu0 0.0
    %v2284 = vand.u32 %v39, 4294901760
    %v2285 = vsub.f32 %v39, %v2284
    %2286 = vmatpush.msra.mxu0 %v2285
    %v2287 = vand.u32 %v38, 4294901760
    %v2288 = vsub.f32 %v38, %v2287
    %2289 = vmatpush.msra.mxu0 %v2288
    %v2290 = vand.u32 %v37, 4294901760
    %v2291 = vsub.f32 %v37, %v2290
    %2292 = vmatpush.msra.mxu0 %v2291
    %v2293 = vand.u32 %v36, 4294901760
    %v2294 = vsub.f32 %v36, %v2293
    %2295 = vmatpush.msra.mxu0 %v2294
    %v2296 = vand.u32 %v2200, 4294901760
    %v2297 = vsub.f32 %v2200, %v2296
    %2298 = vmatmul.f32.gmra.mxu0 %v2297
    %v2299 = vpop.f32.mrf.mxu0
    %v2300 = vadd.f32 %v2270, %v2299
    %2301 = vdwg.mxu0
    %2302 = vmatpush.msra.mxu0 0.0
    %2303 = vmatpush.msra.mxu0 0.0
    %2304 = vmatpush.msra.mxu0 0.0
    %2305 = vmatpush.msra.mxu0 0.0
    %2306 = vmatpush.msra.mxu0 0.0
    %2307 = vmatpush.msra.mxu0 0.0
    %2308 = vmatpush.msra.mxu0 0.0
    %2309 = vmatpush.msra.mxu0 0.0
    %2310 = vmatpush.msra.mxu0 0.0
    %2311 = vmatpush.msra.mxu0 0.0
    %2312 = vmatpush.msra.mxu0 0.0
    %2313 = vmatpush.msra.mxu0 0.0
    %v2314 = vand.u32 %v39, 4294901760
    %2315 = vmatpush.msra.mxu0 %v2314
    %v2316 = vand.u32 %v38, 4294901760
    %2317 = vmatpush.msra.mxu0 %v2316
    %v2318 = vand.u32 %v37, 4294901760
    %2319 = vmatpush.msra.mxu0 %v2318
    %v2320 = vand.u32 %v36, 4294901760
    %2321 = vmatpush.msra.mxu0 %v2320
    %v2322 = vand.u32 %v2200, 4294901760
    %v2323 = vsub.f32 %v2200, %v2322
    %v2324 = vand.u32 %v2323, 4294901760
    %2325 = vmatmul.f32.gmra.mxu0 %v2324
    %v2326 = vpop.f32.mrf.mxu0
    %v2327 = vadd.f32 %v2300, %v2326
    %2328 = vdwg.mxu0
    %2329 = vmatpush.msra.mxu0 0.0
    %2330 = vmatpush.msra.mxu0 0.0
    %2331 = vmatpush.msra.mxu0 0.0
    %2332 = vmatpush.msra.mxu0 0.0
    %2333 = vmatpush.msra.mxu0 0.0
    %2334 = vmatpush.msra.mxu0 0.0
    %2335 = vmatpush.msra.mxu0 0.0
    %2336 = vmatpush.msra.mxu0 0.0
    %2337 = vmatpush.msra.mxu0 0.0
    %2338 = vmatpush.msra.mxu0 0.0
    %2339 = vmatpush.msra.mxu0 0.0
    %2340 = vmatpush.msra.mxu0 0.0
    %v2341 = vand.u32 %v39, 4294901760
    %v2342 = vsub.f32 %v39, %v2341
    %v2343 = vand.u32 %v2342, 4294901760
    %2344 = vmatpush.msra.mxu0 %v2343
    %v2345 = vand.u32 %v38, 4294901760
    %v2346 = vsub.f32 %v38, %v2345
    %v2347 = vand.u32 %v2346, 4294901760
    %2348 = vmatpush.msra.mxu0 %v2347
    %v2349 = vand.u32 %v37, 4294901760
    %v2350 = vsub.f32 %v37, %v2349
    %v2351 = vand.u32 %v2350, 4294901760
    %2352 = vmatpush.msra.mxu0 %v2351
    %v2353 = vand.u32 %v36, 4294901760
    %v2354 = vsub.f32 %v36, %v2353
    %v2355 = vand.u32 %v2354, 4294901760
    %2356 = vmatpush.msra.mxu0 %v2355
    %v2357 = vand.u32 %v2200, 4294901760
    %2358 = vmatmul.f32.gmra.mxu0 %v2357
    %v2359 = vpop.f32.mrf.mxu0
    %v2360 = vadd.f32 %v2327, %v2359
    %2361 = vdwg.mxu0
    %2362 = vmatpush.msra.mxu0 0.0
    %2363 = vmatpush.msra.mxu0 0.0
    %2364 = vmatpush.msra.mxu0 0.0
    %2365 = vmatpush.msra.mxu0 0.0
    %2366 = vmatpush.msra.mxu0 0.0
    %2367 = vmatpush.msra.mxu0 0.0
    %2368 = vmatpush.msra.mxu0 0.0
    %2369 = vmatpush.msra.mxu0 0.0
    %2370 = vmatpush.msra.mxu0 0.0
    %2371 = vmatpush.msra.mxu0 0.0
    %2372 = vmatpush.msra.mxu0 0.0
    %2373 = vmatpush.msra.mxu0 0.0
    %v2374 = vand.u32 %v39, 4294901760
    %2375 = vmatpush.msra.mxu0 %v2374
    %v2376 = vand.u32 %v38, 4294901760
    %2377 = vmatpush.msra.mxu0 %v2376
    %v2378 = vand.u32 %v37, 4294901760
    %2379 = vmatpush.msra.mxu0 %v2378
    %v2380 = vand.u32 %v36, 4294901760
    %2381 = vmatpush.msra.mxu0 %v2380
    %v2382 = vand.u32 %v2200, 4294901760
    %2383 = vmatmul.f32.gmra.mxu0 %v2382
    %v2384 = vpop.f32.mrf.mxu0
    %v2385 = vadd.f32 %v2360, %v2384
    %2386 = vdwg.mxu0
    %vm2387 = vcmask 33792
    %2388 = vst.msk [vmem:[#allocation5] sm:$0x3] %vm2387, %v2385
    // Predicated region
    $region14: #{_lambda_.1} parent=1 // pred_check
      _
    $region15: #{_lambda_.1} parent=1 // pred_check_branch
      %2390 = sbr.rel (0) target = $region17
    $region16: #{_lambda_.1} parent=1 // pred_region
      %2392 = vsyncadd [#allocation4], 0
      %s2394 = sshll.u32 [#allocation5], 4
      %s2395 = int_to_ptr.vmem [resolvable:$true] %s2394
      %s2396 = sshll.u32 %s2, 4
      %s2397 = int_to_ptr.hbm [resolvable:$true] %s2396
      %2399 = dma.vmem_to_hbm [thread:$0]  %s2395, 32, %s2397, [#allocation4]
    $region17: #{_lambda_.1} parent=1 // pred_fallthru
      _
    // Predicated region
    $region18: #{_lambda_.1} parent=1 // pred_check
      _
    $region19: #{_lambda_.1} parent=1 // pred_check_branch
      %2401 = sbr.rel (0) target = $region21
    $region20: #{_lambda_.1} parent=1 // pred_region
      %2403 = dma.done [#allocation4], 32
    $region21: #{_lambda_.1} parent=1 // pred_fallthru
      _
    %2404 = vsyncpa [#allocation3], 1
    %2405 = vsyncpa [#allocation4], 1

</llo_original>
